<compile_context>
chip_gen: v7x
topology: tpu7x:2x2x1
jax: 0.10.0
libtpu: 0.0.40
codegen_flags: <defaults>
</compile_context>

<pallas_src>
import functools
import math

import jax
import jax.numpy as jnp
from jax.experimental import pallas as pl
from jax.experimental.pallas import tpu as pltpu


def _pick_block_b(batch, seq_len, target_rows=512):
    """Batch block: ~target_rows flattened rows per grid step.

    If the batch is split (grid > 1), tb is a multiple of 8 so the (tb, 128) output store is an
    unmasked sublane write and tb*seq_len satisfies the (8,128) block constraint.  For v7x
    (2 TensorCores) an even number of grid steps keeps both cores busy; v5e/v6e are single-TC
    so the largest block that fits is best (raise target_rows if VMEM allows).
    """
    tb = max(1, target_rows // max(seq_len, 1))
    if tb >= batch:
        return batch                       # one grid step: block == full array (always legal)
    if tb >= 8:
        tb = (tb // 8) * 8
    else:
        tb = min(8, batch)
    return min(tb, batch)


def _convnet_kernel(*refs, depth, mxu_dtype):
    f32 = jnp.float32
    eps = 1e-5

    if depth > 1:
        x_ref, wfirst_ref, wrest_ref, slab_ref, wcls_ref, bcls_ref, out_ref = refs
    else:
        x_ref, wfirst_ref, slab_ref, wcls_ref, bcls_ref, out_ref = refs
        wrest_ref = None

    tb = x_ref.shape[0]
    wpad = slab_ref.shape[-1]

    a = x_ref[...].astype(f32)                       # (tb, l_in, c_in), channels-last

    for d in range(depth):
        _, l_d, cin = a.shape
        m = tb * l_d

        # per-tap conv weights, already in MXU dtype (pre-cast in the wrapper)
        if d == 0:
            w0, w1, w2 = wfirst_ref[0], wfirst_ref[1], wfirst_ref[2]       # (c_in, wpad)
        else:
            w0 = wrest_ref[d - 1, 0]                                       # (wpad, wpad)
            w1 = wrest_ref[d - 1, 1]
            w2 = wrest_ref[d - 1, 2]
        slab_d = slab_ref[d]                                               # (3, wpad), f32
        conv_b = slab_d[0:1, :].reshape(1, 1, wpad)
        gamma = slab_d[1:2, :].reshape(1, 1, wpad)
        beta = slab_d[2:3, :].reshape(1, 1, wpad)

        # Conv1d(k=3, pad=1): three per-tap matmuls on time-shifted views.  Shifting inside the
        # (tb, l_d, cin) view means taps never cross a sample boundary -> no masks, and the
        # (m, 3*cin) im2col slab is never materialized.
        a_md = a.astype(mxu_dtype)
        z = jnp.zeros((tb, 1, cin), mxu_dtype)
        prev = jnp.concatenate([z, a_md[:, :l_d - 1, :]], axis=1)          # x[t-1]
        nxt = jnp.concatenate([a_md[:, 1:, :], z], axis=1)                 # x[t+1]
        y = (jnp.dot(prev.reshape(m, cin), w0, preferred_element_type=f32)
             + jnp.dot(a_md.reshape(m, cin), w1, preferred_element_type=f32)
             + jnp.dot(nxt.reshape(m, cin), w2, preferred_element_type=f32))
        y = y.reshape(tb, l_d, wpad) + conv_b                              # (tb, l_d, wpad) f32

        # InstanceNorm1d (biased variance, eps=1e-5): plain reductions over the time axis.
        mu = jnp.mean(y, axis=1, keepdims=True)
        diff = y - mu
        var = jnp.mean(diff * diff, axis=1, keepdims=True)
        h = diff * jax.lax.rsqrt(var + eps) * gamma + beta

        # ReLU
        h = jnp.maximum(h, 0.0)

        # AvgPool1d(k=2, s=2): pairwise mean over time (no pooling matmul).
        a = jnp.mean(h.reshape(tb, l_d // 2, 2, wpad), axis=2)             # (tb, l_d//2, wpad)

    # Flatten (time-major / channel-minor) + classifier: ONE lane-dense matmul.  w_cls was packed
    # in the wrapper as (l_f*wpad, c_pad) with exactly this row ordering (and zero rows for the
    # padded channels), so this matches PyTorch's channel-major out.view(B, -1) @ W.
    l_f = a.shape[1]
    feat = a.reshape(tb, l_f * wpad).astype(mxu_dtype)
    out = jnp.dot(feat, wcls_ref[...], preferred_element_type=f32) + bcls_ref[...]
    out_ref[...] = out


def convnet_forward(x, params, *, net_depth, net_width, num_classes,
                    block_b=None, mxu_dtype=jnp.float32):
    """x: (B, channel, im_size) float32 (same layout as the PyTorch module input).

    mxu_dtype=jnp.bfloat16 pre-casts conv/classifier weights to bf16 in the wrapper and feeds
    bf16 MXU operands (recommended on v6e/v7x); accumulation and normalization stay f32.
    """
    B, c_in, im_size = x.shape
    assert im_size % (2 ** net_depth) == 0, "im_size must be divisible by 2**net_depth"
    l_final = im_size // (2 ** net_depth)
    assert l_final >= 1

    f32 = jnp.float32
    wpad = 128 * ((net_width + 127) // 128)          # lane-dense activation channels
    c_pad = 128 * ((num_classes + 127) // 128)       # lane-dense output stores

    tb = int(block_b) if block_b is not None else _pick_block_b(B, im_size)
    b_pad = pl.cdiv(B, tb) * tb
    if b_pad // tb > 1:
        assert (tb * im_size) % 8 == 0, "tb*im_size must be a multiple of 8 when grid > 1"

    xk = x.astype(f32)
    if b_pad != B:
        xk = jnp.pad(xk, ((0, b_pad - B), (0, 0), (0, 0)))
    xk = jnp.transpose(xk, (0, 2, 1))                # (b_pad, im_size, c_in), channels-last

    # ---- pack parameters into a few dense, pre-padded slabs --------------------------------
    def pack_conv(w):    # torch (C_out, C_in, 3) -> (3, C_in, wpad): per-tap, out-ch zero-padded
        wt = jnp.transpose(w, (2, 1, 0))
        return jnp.pad(wt, ((0, 0), (0, 0), (0, wpad - w.shape[0])))

    w_first = pack_conv(params["conv0_w"]).astype(mxu_dtype)                 # (3, c_in, wpad)
    if net_depth > 1:
        w_rest = jnp.stack([
            jnp.pad(pack_conv(params[f"conv{d}_w"]),
                    ((0, 0), (0, wpad - net_width), (0, 0)))
            for d in range(1, net_depth)]).astype(mxu_dtype)                 # (D-1, 3, wpad, wpad)

    def pad_vec(v):
        return jnp.pad(v, (0, wpad - net_width))

    # padded channels get bias=0, gamma=0, beta=0 -> they stay exactly 0 through every layer
    slab = jnp.stack([jnp.stack([pad_vec(params[f"conv{d}_b"]),
                                 pad_vec(params[f"in{d}_g"]),
                                 pad_vec(params[f"in{d}_b"])])
                      for d in range(net_depth)]).astype(f32)                # (D, 3, wpad)

    # classifier weight, repacked to (l_f*wpad, c_pad) with row index = t*wpad + c
    w_cls = jnp.pad(params["cls_w"], ((0, 0), (0, c_pad - num_classes)))     # (W*l_f, c_pad)
    w_cls = w_cls.reshape(net_width, l_final, c_pad).transpose(1, 0, 2)      # (l_f, W, c_pad)
    w_cls = jnp.pad(w_cls, ((0, 0), (0, wpad - net_width), (0, 0)))          # (l_f, wpad, c_pad)
    w_cls = w_cls.reshape(l_final * wpad, c_pad).astype(mxu_dtype)
    b_cls = jnp.pad(params["cls_b"], (0, c_pad - num_classes)).reshape(1, c_pad).astype(f32)

    kernel = functools.partial(_convnet_kernel, depth=net_depth, mxu_dtype=mxu_dtype)

    def const_spec(arr):
        nd = arr.ndim
        return pl.BlockSpec(arr.shape, lambda i, _nd=nd: (0,) * _nd)

    inputs = [xk, w_first]
    in_specs = [pl.BlockSpec((tb, im_size, c_in), lambda i: (i, 0, 0)),
                const_spec(w_first)]
    if net_depth > 1:
        inputs.append(w_rest)
        in_specs.append(const_spec(w_rest))
    inputs += [slab, w_cls, b_cls]
    in_specs += [const_spec(slab), const_spec(w_cls), const_spec(b_cls)]

    out = pl.pallas_call(
        kernel,
        out_shape=jax.ShapeDtypeStruct((b_pad, c_pad), jnp.float32),
        grid_spec=pltpu.PrefetchScalarGridSpec(
            num_scalar_prefetch=0,
            grid=(b_pad // tb,),
            in_specs=in_specs,
            out_specs=pl.BlockSpec((tb, c_pad), lambda i: (i, 0)),
        ),
        compiler_params=pltpu.CompilerParams(dimension_semantics=("parallel",)),
    )(*inputs)

    return out[:B, :num_classes]


# ---------------------------------------------------------------------------------------------
# Pure-JAX reference mirroring the PyTorch ConvNet forward (relu / IN / avgpool config).
# ---------------------------------------------------------------------------------------------
def _ref_conv1d(x, w, b):
    # x: (B, C_in, L); w: (C_out, C_in, 3); b: (C_out,); padding=1
    xp = jnp.pad(x, ((0, 0), (0, 0), (1, 1)))
    L = x.shape[2]
    out = jnp.zeros((x.shape[0], w.shape[0], L), x.dtype)
    for k in range(3):
        out = out + jnp.einsum("bcl,oc->bol", xp[:, :, k:k + L], w[:, :, k])
    return out + b[None, :, None]


def reference_forward(x, params, *, net_depth):
    h = x.astype(jnp.float32)
    for d in range(net_depth):
        h = _ref_conv1d(h, params[f"conv{d}_w"], params[f"conv{d}_b"])
        mu = jnp.mean(h, axis=2, keepdims=True)
        var = jnp.mean((h - mu) ** 2, axis=2, keepdims=True)
        h = (h - mu) * jax.lax.rsqrt(var + 1e-5)
        h = h * params[f"in{d}_g"][None, :, None] + params[f"in{d}_b"][None, :, None]
        h = jnp.maximum(h, 0.0)
        B_, C_, L_ = h.shape
        h = h.reshape(B_, C_, L_ // 2, 2).mean(axis=3)
    feat = h.reshape(h.shape[0], -1)        # channel-major flatten, like out.view(B, -1)
    return feat @ params["cls_w"] + params["cls_b"]


def init_params(key, c_in, num_classes, net_width, net_depth, im_size):
    """Deterministic synthetic weights in PyTorch layouts (conv: (C_out, C_in, 3))."""
    p = {}
    keys = jax.random.split(key, 2 * net_depth + 1)
    cin = c_in
    for d in range(net_depth):
        bound = 1.0 / math.sqrt(cin * 3)
        k1, k2 = jax.random.split(keys[d])
        p[f"conv{d}_w"] = jax.random.uniform(k1, (net_width, cin, 3), jnp.float32, -bound, bound)
        p[f"conv{d}_b"] = jax.random.uniform(k2, (net_width,), jnp.float32, -bound, bound)
        kg, kb = jax.random.split(keys[net_depth + d])
        p[f"in{d}_g"] = 1.0 + 0.1 * jax.random.normal(kg, (net_width,), jnp.float32)
        p[f"in{d}_b"] = 0.1 * jax.random.normal(kb, (net_width,), jnp.float32)
        cin = net_width
    l_f = im_size // (2 ** net_depth)
    num_feat = net_width * l_f
    bound = 1.0 / math.sqrt(num_feat)
    k1, k2 = jax.random.split(keys[-1])
    p["cls_w"] = jax.random.uniform(k1, (num_feat, num_classes), jnp.float32, -bound, bound)
    p["cls_b"] = jax.random.uniform(k2, (num_classes,), jnp.float32, -bound, bound)
    return p


if __name__ == "__main__":
    B, C_IN, IM_SIZE = 2, 4, 16
    NET_WIDTH, NET_DEPTH, NUM_CLASSES = 64, 3, 3

    key = jax.random.PRNGKey(0)
    kx, kp = jax.random.split(key)
    x = jax.random.normal(kx, (B, C_IN, IM_SIZE), jnp.float32)      # (bs, channel, im_size)
    params = init_params(kp, C_IN, NUM_CLASSES, NET_WIDTH, NET_DEPTH, IM_SIZE)

    ref = reference_forward(x, params, net_depth=NET_DEPTH)

    # f32 MXU operands (default; tight tolerance, safe on v5e).
    out = convnet_forward(x, params, net_depth=NET_DEPTH, net_width=NET_WIDTH,
                          num_classes=NUM_CLASSES)
    out = jax.block_until_ready(out)
    assert out.shape == (B, NUM_CLASSES)
    assert jnp.allclose(out, ref, atol=5e-4, rtol=5e-4), (out, ref)

    # bf16 MXU operands (recommended on v6e/v7x); accumulation/norm stay f32, looser tolerance.
    out_bf16 = convnet_forward(x, params, net_depth=NET_DEPTH, net_width=NET_WIDTH,
                               num_classes=NUM_CLASSES, mxu_dtype=jnp.bfloat16)
    out_bf16 = jax.block_until_ready(out_bf16)
    assert jnp.allclose(out_bf16, ref, atol=1e-1, rtol=1e-1), (out_bf16, ref)

    print("KERNEL_OK")
</pallas_src>

<mosaic_0001>
module attributes {stable_mosaic.version = 11 : i64} {
  func.func @_convnet_kernel(%arg0: i32, %arg1: memref<2x16x4xf32, #tpu.memory_space<vmem>>, %arg2: memref<3x4x128xf32, #tpu.memory_space<vmem>>, %arg3: memref<2x3x128x128xf32, #tpu.memory_space<vmem>>, %arg4: memref<3x3x128xf32, #tpu.memory_space<vmem>>, %arg5: memref<256x128xf32, #tpu.memory_space<vmem>>, %arg6: memref<1x128xf32, #tpu.memory_space<vmem>>, %arg7: memref<2x128xf32, #tpu.memory_space<vmem>>) attributes {dimension_semantics = [#tpu.dimension_semantics<parallel>], iteration_bounds = array<i64: 1>, scalar_prefetch = 0 : i64, scratch_operands = 0 : i64, tpu.core_type = #tpu.core_type<tc>, window_params = [{transform_indices = @transform_0, window_bounds = array<i64: 2, 16, 4>}, {pipeline_mode = #tpu.pipeline_mode<synchronous>, transform_indices = @transform_1, window_bounds = array<i64: 3, 4, 128>}, {pipeline_mode = #tpu.pipeline_mode<synchronous>, transform_indices = @transform_2, window_bounds = array<i64: 2, 3, 128, 128>}, {pipeline_mode = #tpu.pipeline_mode<synchronous>, transform_indices = @transform_3, window_bounds = array<i64: 3, 3, 128>}, {pipeline_mode = #tpu.pipeline_mode<synchronous>, transform_indices = @transform_4, window_bounds = array<i64: 256, 128>}, {pipeline_mode = #tpu.pipeline_mode<synchronous>, transform_indices = @transform_5, window_bounds = array<i64: 1, 128>}, {transform_indices = @transform_6, window_bounds = array<i64: 2, 128>}]} {
    %c0 = arith.constant 0 : index
    %c0_0 = arith.constant 0 : index
    %c0_1 = arith.constant 0 : index
    %0 = vector.load %arg1[%c0, %c0_0, %c0_1] : memref<2x16x4xf32, #tpu.memory_space<vmem>>, vector<2x16x4xf32>
    %c0_2 = arith.constant 0 : index
    %c0_3 = arith.constant 0 : index
    %c0_4 = arith.constant 0 : index
    %1 = vector.load %arg2[%c0_2, %c0_3, %c0_4] : memref<3x4x128xf32, #tpu.memory_space<vmem>>, vector<1x4x128xf32>
    %2 = vector.shape_cast %1 : vector<1x4x128xf32> to vector<4x128xf32>
    %c1 = arith.constant 1 : index
    %c0_5 = arith.constant 0 : index
    %c0_6 = arith.constant 0 : index
    %3 = vector.load %arg2[%c1, %c0_5, %c0_6] : memref<3x4x128xf32, #tpu.memory_space<vmem>>, vector<1x4x128xf32>
    %4 = vector.shape_cast %3 : vector<1x4x128xf32> to vector<4x128xf32>
    %c2 = arith.constant 2 : index
    %c0_7 = arith.constant 0 : index
    %c0_8 = arith.constant 0 : index
    %5 = vector.load %arg2[%c2, %c0_7, %c0_8] : memref<3x4x128xf32, #tpu.memory_space<vmem>>, vector<1x4x128xf32>
    %6 = vector.shape_cast %5 : vector<1x4x128xf32> to vector<4x128xf32>
    %c0_9 = arith.constant 0 : index
    %c0_10 = arith.constant 0 : index
    %c0_11 = arith.constant 0 : index
    %7 = vector.load %arg4[%c0_9, %c0_10, %c0_11] : memref<3x3x128xf32, #tpu.memory_space<vmem>>, vector<1x3x128xf32>
    %8 = vector.shape_cast %7 : vector<1x3x128xf32> to vector<3x128xf32>
    %9 = vector.extract_strided_slice %8 {offsets = [0, 0], sizes = [1, 128], strides = [1, 1]} : vector<3x128xf32> to vector<1x128xf32>
    %10 = vector.shape_cast %9 : vector<1x128xf32> to vector<1x1x128xf32>
    %11 = vector.extract_strided_slice %8 {offsets = [1, 0], sizes = [1, 128], strides = [1, 1]} : vector<3x128xf32> to vector<1x128xf32>
    %12 = vector.shape_cast %11 : vector<1x128xf32> to vector<1x1x128xf32>
    %13 = vector.extract_strided_slice %8 {offsets = [2, 0], sizes = [1, 128], strides = [1, 1]} : vector<3x128xf32> to vector<1x128xf32>
    %14 = vector.shape_cast %13 : vector<1x128xf32> to vector<1x1x128xf32>
    %cst = arith.constant 0.000000e+00 : f32
    %15 = vector.broadcast %cst : f32 to vector<2x1x4xf32>
    %16 = vector.extract_strided_slice %0 {offsets = [0, 0, 0], sizes = [2, 15, 4], strides = [1, 1, 1]} : vector<2x16x4xf32> to vector<2x15x4xf32>
    %17 = tpu.concatenate %15, %16 in 1 : vector<2x1x4xf32>, vector<2x15x4xf32> -> vector<2x16x4xf32>
    %18 = vector.extract_strided_slice %0 {offsets = [0, 1, 0], sizes = [2, 15, 4], strides = [1, 1, 1]} : vector<2x16x4xf32> to vector<2x15x4xf32>
    %19 = tpu.concatenate %18, %15 in 1 : vector<2x15x4xf32>, vector<2x1x4xf32> -> vector<2x16x4xf32>
    %20 = vector.shape_cast %17 : vector<2x16x4xf32> to vector<32x4xf32>
    %cst_12 = arith.constant dense<0.000000e+00> : vector<32x128xf32>
    %21 = tpu.matmul %20, %2, %cst_12 {dimension_numbers = #tpu.dot_dimension_numbers<[1], [0], [0], [1], [0, 0, 1, 1], [], []>} : vector<32x4xf32>, vector<4x128xf32>, vector<32x128xf32> -> vector<32x128xf32>
    %22 = vector.shape_cast %0 : vector<2x16x4xf32> to vector<32x4xf32>
    %cst_13 = arith.constant dense<0.000000e+00> : vector<32x128xf32>
    %23 = tpu.matmul %22, %4, %cst_13 {dimension_numbers = #tpu.dot_dimension_numbers<[1], [0], [0], [1], [0, 0, 1, 1], [], []>} : vector<32x4xf32>, vector<4x128xf32>, vector<32x128xf32> -> vector<32x128xf32>
    %24 = arith.addf %21, %23 : vector<32x128xf32>
    %25 = vector.shape_cast %19 : vector<2x16x4xf32> to vector<32x4xf32>
    %cst_14 = arith.constant dense<0.000000e+00> : vector<32x128xf32>
    %26 = tpu.matmul %25, %6, %cst_14 {dimension_numbers = #tpu.dot_dimension_numbers<[1], [0], [0], [1], [0, 0, 1, 1], [], []>} : vector<32x4xf32>, vector<4x128xf32>, vector<32x128xf32> -> vector<32x128xf32>
    %27 = arith.addf %24, %26 : vector<32x128xf32>
    %28 = vector.shape_cast %27 : vector<32x128xf32> to vector<2x16x128xf32>
    %29 = vector.broadcast %10 : vector<1x1x128xf32> to vector<2x16x128xf32>
    %30 = arith.addf %28, %29 : vector<2x16x128xf32>
    %cst_15 = arith.constant dense<0.000000e+00> : vector<2x128xf32>
    %31 = vector.multi_reduction <add>, %30, %cst_15 [1] : vector<2x16x128xf32> to vector<2x128xf32>
    %32 = vector.shape_cast %31 : vector<2x128xf32> to vector<2x1x128xf32>
    %cst_16 = arith.constant 1.600000e+01 : f32
    %33 = vector.broadcast %cst_16 : f32 to vector<2x1x128xf32>
    %34 = arith.divf %32, %33 : vector<2x1x128xf32>
    %35 = vector.broadcast %34 : vector<2x1x128xf32> to vector<2x16x128xf32>
    %36 = arith.subf %30, %35 : vector<2x16x128xf32>
    %37 = arith.mulf %36, %36 : vector<2x16x128xf32>
    %cst_17 = arith.constant dense<0.000000e+00> : vector<2x128xf32>
    %38 = vector.multi_reduction <add>, %37, %cst_17 [1] : vector<2x16x128xf32> to vector<2x128xf32>
    %39 = vector.shape_cast %38 : vector<2x128xf32> to vector<2x1x128xf32>
    %cst_18 = arith.constant 1.600000e+01 : f32
    %40 = vector.broadcast %cst_18 : f32 to vector<2x1x128xf32>
    %41 = arith.divf %39, %40 : vector<2x1x128xf32>
    %cst_19 = arith.constant 9.99999974E-6 : f32
    %42 = vector.broadcast %cst_19 : f32 to vector<2x1x128xf32>
    %43 = arith.addf %41, %42 : vector<2x1x128xf32>
    %44 = math.rsqrt %43 : vector<2x1x128xf32>
    %45 = vector.broadcast %44 : vector<2x1x128xf32> to vector<2x16x128xf32>
    %46 = arith.mulf %36, %45 : vector<2x16x128xf32>
    %47 = vector.broadcast %12 : vector<1x1x128xf32> to vector<2x16x128xf32>
    %48 = arith.mulf %46, %47 : vector<2x16x128xf32>
    %49 = vector.broadcast %14 : vector<1x1x128xf32> to vector<2x16x128xf32>
    %50 = arith.addf %48, %49 : vector<2x16x128xf32>
    %cst_20 = arith.constant 0.000000e+00 : f32
    %51 = vector.broadcast %cst_20 : f32 to vector<2x16x128xf32>
    %52 = arith.maximumf %50, %51 : vector<2x16x128xf32>
    %53 = vector.shape_cast %52 : vector<2x16x128xf32> to vector<2x8x2x128xf32>
    %cst_21 = arith.constant dense<0.000000e+00> : vector<2x8x128xf32>
    %54 = vector.multi_reduction <add>, %53, %cst_21 [2] : vector<2x8x2x128xf32> to vector<2x8x128xf32>
    %cst_22 = arith.constant 2.000000e+00 : f32
    %55 = vector.broadcast %cst_22 : f32 to vector<2x8x128xf32>
    %56 = arith.divf %54, %55 : vector<2x8x128xf32>
    %c0_23 = arith.constant 0 : index
    %c0_24 = arith.constant 0 : index
    %c0_25 = arith.constant 0 : index
    %c0_26 = arith.constant 0 : index
    %57 = vector.load %arg3[%c0_23, %c0_24, %c0_25, %c0_26] : memref<2x3x128x128xf32, #tpu.memory_space<vmem>>, vector<1x1x128x128xf32>
    %58 = vector.shape_cast %57 : vector<1x1x128x128xf32> to vector<128x128xf32>
    %c0_27 = arith.constant 0 : index
    %c1_28 = arith.constant 1 : index
    %c0_29 = arith.constant 0 : index
    %c0_30 = arith.constant 0 : index
    %59 = vector.load %arg3[%c0_27, %c1_28, %c0_29, %c0_30] : memref<2x3x128x128xf32, #tpu.memory_space<vmem>>, vector<1x1x128x128xf32>
    %60 = vector.shape_cast %59 : vector<1x1x128x128xf32> to vector<128x128xf32>
    %c0_31 = arith.constant 0 : index
    %c2_32 = arith.constant 2 : index
    %c0_33 = arith.constant 0 : index
    %c0_34 = arith.constant 0 : index
    %61 = vector.load %arg3[%c0_31, %c2_32, %c0_33, %c0_34] : memref<2x3x128x128xf32, #tpu.memory_space<vmem>>, vector<1x1x128x128xf32>
    %62 = vector.shape_cast %61 : vector<1x1x128x128xf32> to vector<128x128xf32>
    %c1_35 = arith.constant 1 : index
    %c0_36 = arith.constant 0 : index
    %c0_37 = arith.constant 0 : index
    %63 = vector.load %arg4[%c1_35, %c0_36, %c0_37] : memref<3x3x128xf32, #tpu.memory_space<vmem>>, vector<1x3x128xf32>
    %64 = vector.shape_cast %63 : vector<1x3x128xf32> to vector<3x128xf32>
    %65 = vector.extract_strided_slice %64 {offsets = [0, 0], sizes = [1, 128], strides = [1, 1]} : vector<3x128xf32> to vector<1x128xf32>
    %66 = vector.shape_cast %65 : vector<1x128xf32> to vector<1x1x128xf32>
    %67 = vector.extract_strided_slice %64 {offsets = [1, 0], sizes = [1, 128], strides = [1, 1]} : vector<3x128xf32> to vector<1x128xf32>
    %68 = vector.shape_cast %67 : vector<1x128xf32> to vector<1x1x128xf32>
    %69 = vector.extract_strided_slice %64 {offsets = [2, 0], sizes = [1, 128], strides = [1, 1]} : vector<3x128xf32> to vector<1x128xf32>
    %70 = vector.shape_cast %69 : vector<1x128xf32> to vector<1x1x128xf32>
    %cst_38 = arith.constant 0.000000e+00 : f32
    %71 = vector.broadcast %cst_38 : f32 to vector<2x1x128xf32>
    %72 = vector.extract_strided_slice %56 {offsets = [0, 0, 0], sizes = [2, 7, 128], strides = [1, 1, 1]} : vector<2x8x128xf32> to vector<2x7x128xf32>
    %73 = tpu.concatenate %71, %72 in 1 : vector<2x1x128xf32>, vector<2x7x128xf32> -> vector<2x8x128xf32>
    %74 = vector.extract_strided_slice %56 {offsets = [0, 1, 0], sizes = [2, 7, 128], strides = [1, 1, 1]} : vector<2x8x128xf32> to vector<2x7x128xf32>
    %75 = tpu.concatenate %74, %71 in 1 : vector<2x7x128xf32>, vector<2x1x128xf32> -> vector<2x8x128xf32>
    %76 = vector.shape_cast %73 : vector<2x8x128xf32> to vector<16x128xf32>
    %cst_39 = arith.constant dense<0.000000e+00> : vector<16x128xf32>
    %77 = tpu.matmul %76, %58, %cst_39 {dimension_numbers = #tpu.dot_dimension_numbers<[1], [0], [0], [1], [0, 0, 1, 1], [], []>} : vector<16x128xf32>, vector<128x128xf32>, vector<16x128xf32> -> vector<16x128xf32>
    %78 = vector.shape_cast %56 : vector<2x8x128xf32> to vector<16x128xf32>
    %cst_40 = arith.constant dense<0.000000e+00> : vector<16x128xf32>
    %79 = tpu.matmul %78, %60, %cst_40 {dimension_numbers = #tpu.dot_dimension_numbers<[1], [0], [0], [1], [0, 0, 1, 1], [], []>} : vector<16x128xf32>, vector<128x128xf32>, vector<16x128xf32> -> vector<16x128xf32>
    %80 = arith.addf %77, %79 : vector<16x128xf32>
    %81 = vector.shape_cast %75 : vector<2x8x128xf32> to vector<16x128xf32>
    %cst_41 = arith.constant dense<0.000000e+00> : vector<16x128xf32>
    %82 = tpu.matmul %81, %62, %cst_41 {dimension_numbers = #tpu.dot_dimension_numbers<[1], [0], [0], [1], [0, 0, 1, 1], [], []>} : vector<16x128xf32>, vector<128x128xf32>, vector<16x128xf32> -> vector<16x128xf32>
    %83 = arith.addf %80, %82 : vector<16x128xf32>
    %84 = vector.shape_cast %83 : vector<16x128xf32> to vector<2x8x128xf32>
    %85 = vector.broadcast %66 : vector<1x1x128xf32> to vector<2x8x128xf32>
    %86 = arith.addf %84, %85 : vector<2x8x128xf32>
    %cst_42 = arith.constant dense<0.000000e+00> : vector<2x128xf32>
    %87 = vector.multi_reduction <add>, %86, %cst_42 [1] : vector<2x8x128xf32> to vector<2x128xf32>
    %88 = vector.shape_cast %87 : vector<2x128xf32> to vector<2x1x128xf32>
    %cst_43 = arith.constant 8.000000e+00 : f32
    %89 = vector.broadcast %cst_43 : f32 to vector<2x1x128xf32>
    %90 = arith.divf %88, %89 : vector<2x1x128xf32>
    %91 = vector.broadcast %90 : vector<2x1x128xf32> to vector<2x8x128xf32>
    %92 = arith.subf %86, %91 : vector<2x8x128xf32>
    %93 = arith.mulf %92, %92 : vector<2x8x128xf32>
    %cst_44 = arith.constant dense<0.000000e+00> : vector<2x128xf32>
    %94 = vector.multi_reduction <add>, %93, %cst_44 [1] : vector<2x8x128xf32> to vector<2x128xf32>
    %95 = vector.shape_cast %94 : vector<2x128xf32> to vector<2x1x128xf32>
    %cst_45 = arith.constant 8.000000e+00 : f32
    %96 = vector.broadcast %cst_45 : f32 to vector<2x1x128xf32>
    %97 = arith.divf %95, %96 : vector<2x1x128xf32>
    %cst_46 = arith.constant 9.99999974E-6 : f32
    %98 = vector.broadcast %cst_46 : f32 to vector<2x1x128xf32>
    %99 = arith.addf %97, %98 : vector<2x1x128xf32>
    %100 = math.rsqrt %99 : vector<2x1x128xf32>
    %101 = vector.broadcast %100 : vector<2x1x128xf32> to vector<2x8x128xf32>
    %102 = arith.mulf %92, %101 : vector<2x8x128xf32>
    %103 = vector.broadcast %68 : vector<1x1x128xf32> to vector<2x8x128xf32>
    %104 = arith.mulf %102, %103 : vector<2x8x128xf32>
    %105 = vector.broadcast %70 : vector<1x1x128xf32> to vector<2x8x128xf32>
    %106 = arith.addf %104, %105 : vector<2x8x128xf32>
    %cst_47 = arith.constant 0.000000e+00 : f32
    %107 = vector.broadcast %cst_47 : f32 to vector<2x8x128xf32>
    %108 = arith.maximumf %106, %107 : vector<2x8x128xf32>
    %109 = vector.shape_cast %108 : vector<2x8x128xf32> to vector<2x4x2x128xf32>
    %cst_48 = arith.constant dense<0.000000e+00> : vector<2x4x128xf32>
    %110 = vector.multi_reduction <add>, %109, %cst_48 [2] : vector<2x4x2x128xf32> to vector<2x4x128xf32>
    %cst_49 = arith.constant 2.000000e+00 : f32
    %111 = vector.broadcast %cst_49 : f32 to vector<2x4x128xf32>
    %112 = arith.divf %110, %111 : vector<2x4x128xf32>
    %c1_50 = arith.constant 1 : index
    %c0_51 = arith.constant 0 : index
    %c0_52 = arith.constant 0 : index
    %c0_53 = arith.constant 0 : index
    %113 = vector.load %arg3[%c1_50, %c0_51, %c0_52, %c0_53] : memref<2x3x128x128xf32, #tpu.memory_space<vmem>>, vector<1x1x128x128xf32>
    %114 = vector.shape_cast %113 : vector<1x1x128x128xf32> to vector<128x128xf32>
    %c1_54 = arith.constant 1 : index
    %c1_55 = arith.constant 1 : index
    %c0_56 = arith.constant 0 : index
    %c0_57 = arith.constant 0 : index
    %115 = vector.load %arg3[%c1_54, %c1_55, %c0_56, %c0_57] : memref<2x3x128x128xf32, #tpu.memory_space<vmem>>, vector<1x1x128x128xf32>
    %116 = vector.shape_cast %115 : vector<1x1x128x128xf32> to vector<128x128xf32>
    %c1_58 = arith.constant 1 : index
    %c2_59 = arith.constant 2 : index
    %c0_60 = arith.constant 0 : index
    %c0_61 = arith.constant 0 : index
    %117 = vector.load %arg3[%c1_58, %c2_59, %c0_60, %c0_61] : memref<2x3x128x128xf32, #tpu.memory_space<vmem>>, vector<1x1x128x128xf32>
    %118 = vector.shape_cast %117 : vector<1x1x128x128xf32> to vector<128x128xf32>
    %c2_62 = arith.constant 2 : index
    %c0_63 = arith.constant 0 : index
    %c0_64 = arith.constant 0 : index
    %119 = vector.load %arg4[%c2_62, %c0_63, %c0_64] : memref<3x3x128xf32, #tpu.memory_space<vmem>>, vector<1x3x128xf32>
    %120 = vector.shape_cast %119 : vector<1x3x128xf32> to vector<3x128xf32>
    %121 = vector.extract_strided_slice %120 {offsets = [0, 0], sizes = [1, 128], strides = [1, 1]} : vector<3x128xf32> to vector<1x128xf32>
    %122 = vector.shape_cast %121 : vector<1x128xf32> to vector<1x1x128xf32>
    %123 = vector.extract_strided_slice %120 {offsets = [1, 0], sizes = [1, 128], strides = [1, 1]} : vector<3x128xf32> to vector<1x128xf32>
    %124 = vector.shape_cast %123 : vector<1x128xf32> to vector<1x1x128xf32>
    %125 = vector.extract_strided_slice %120 {offsets = [2, 0], sizes = [1, 128], strides = [1, 1]} : vector<3x128xf32> to vector<1x128xf32>
    %126 = vector.shape_cast %125 : vector<1x128xf32> to vector<1x1x128xf32>
    %cst_65 = arith.constant 0.000000e+00 : f32
    %127 = vector.broadcast %cst_65 : f32 to vector<2x1x128xf32>
    %128 = vector.extract_strided_slice %112 {offsets = [0, 0, 0], sizes = [2, 3, 128], strides = [1, 1, 1]} : vector<2x4x128xf32> to vector<2x3x128xf32>
    %129 = tpu.concatenate %127, %128 in 1 : vector<2x1x128xf32>, vector<2x3x128xf32> -> vector<2x4x128xf32>
    %130 = vector.extract_strided_slice %112 {offsets = [0, 1, 0], sizes = [2, 3, 128], strides = [1, 1, 1]} : vector<2x4x128xf32> to vector<2x3x128xf32>
    %131 = tpu.concatenate %130, %127 in 1 : vector<2x3x128xf32>, vector<2x1x128xf32> -> vector<2x4x128xf32>
    %132 = vector.shape_cast %129 : vector<2x4x128xf32> to vector<8x128xf32>
    %cst_66 = arith.constant dense<0.000000e+00> : vector<8x128xf32>
    %133 = tpu.matmul %132, %114, %cst_66 {dimension_numbers = #tpu.dot_dimension_numbers<[1], [0], [0], [1], [0, 0, 1, 1], [], []>} : vector<8x128xf32>, vector<128x128xf32>, vector<8x128xf32> -> vector<8x128xf32>
    %134 = vector.shape_cast %112 : vector<2x4x128xf32> to vector<8x128xf32>
    %cst_67 = arith.constant dense<0.000000e+00> : vector<8x128xf32>
    %135 = tpu.matmul %134, %116, %cst_67 {dimension_numbers = #tpu.dot_dimension_numbers<[1], [0], [0], [1], [0, 0, 1, 1], [], []>} : vector<8x128xf32>, vector<128x128xf32>, vector<8x128xf32> -> vector<8x128xf32>
    %136 = arith.addf %133, %135 : vector<8x128xf32>
    %137 = vector.shape_cast %131 : vector<2x4x128xf32> to vector<8x128xf32>
    %cst_68 = arith.constant dense<0.000000e+00> : vector<8x128xf32>
    %138 = tpu.matmul %137, %118, %cst_68 {dimension_numbers = #tpu.dot_dimension_numbers<[1], [0], [0], [1], [0, 0, 1, 1], [], []>} : vector<8x128xf32>, vector<128x128xf32>, vector<8x128xf32> -> vector<8x128xf32>
    %139 = arith.addf %136, %138 : vector<8x128xf32>
    %140 = vector.shape_cast %139 : vector<8x128xf32> to vector<2x4x128xf32>
    %141 = vector.broadcast %122 : vector<1x1x128xf32> to vector<2x4x128xf32>
    %142 = arith.addf %140, %141 : vector<2x4x128xf32>
    %cst_69 = arith.constant dense<0.000000e+00> : vector<2x128xf32>
    %143 = vector.multi_reduction <add>, %142, %cst_69 [1] : vector<2x4x128xf32> to vector<2x128xf32>
    %144 = vector.shape_cast %143 : vector<2x128xf32> to vector<2x1x128xf32>
    %cst_70 = arith.constant 4.000000e+00 : f32
    %145 = vector.broadcast %cst_70 : f32 to vector<2x1x128xf32>
    %146 = arith.divf %144, %145 : vector<2x1x128xf32>
    %147 = vector.broadcast %146 : vector<2x1x128xf32> to vector<2x4x128xf32>
    %148 = arith.subf %142, %147 : vector<2x4x128xf32>
    %149 = arith.mulf %148, %148 : vector<2x4x128xf32>
    %cst_71 = arith.constant dense<0.000000e+00> : vector<2x128xf32>
    %150 = vector.multi_reduction <add>, %149, %cst_71 [1] : vector<2x4x128xf32> to vector<2x128xf32>
    %151 = vector.shape_cast %150 : vector<2x128xf32> to vector<2x1x128xf32>
    %cst_72 = arith.constant 4.000000e+00 : f32
    %152 = vector.broadcast %cst_72 : f32 to vector<2x1x128xf32>
    %153 = arith.divf %151, %152 : vector<2x1x128xf32>
    %cst_73 = arith.constant 9.99999974E-6 : f32
    %154 = vector.broadcast %cst_73 : f32 to vector<2x1x128xf32>
    %155 = arith.addf %153, %154 : vector<2x1x128xf32>
    %156 = math.rsqrt %155 : vector<2x1x128xf32>
    %157 = vector.broadcast %156 : vector<2x1x128xf32> to vector<2x4x128xf32>
    %158 = arith.mulf %148, %157 : vector<2x4x128xf32>
    %159 = vector.broadcast %124 : vector<1x1x128xf32> to vector<2x4x128xf32>
    %160 = arith.mulf %158, %159 : vector<2x4x128xf32>
    %161 = vector.broadcast %126 : vector<1x1x128xf32> to vector<2x4x128xf32>
    %162 = arith.addf %160, %161 : vector<2x4x128xf32>
    %cst_74 = arith.constant 0.000000e+00 : f32
    %163 = vector.broadcast %cst_74 : f32 to vector<2x4x128xf32>
    %164 = arith.maximumf %162, %163 : vector<2x4x128xf32>
    %165 = vector.shape_cast %164 : vector<2x4x128xf32> to vector<2x2x2x128xf32>
    %cst_75 = arith.constant dense<0.000000e+00> : vector<2x2x128xf32>
    %166 = vector.multi_reduction <add>, %165, %cst_75 [2] : vector<2x2x2x128xf32> to vector<2x2x128xf32>
    %cst_76 = arith.constant 2.000000e+00 : f32
    %167 = vector.broadcast %cst_76 : f32 to vector<2x2x128xf32>
    %168 = arith.divf %166, %167 : vector<2x2x128xf32>
    %169 = vector.shape_cast %168 : vector<2x2x128xf32> to vector<2x256xf32>
    %c0_77 = arith.constant 0 : index
    %c0_78 = arith.constant 0 : index
    %170 = vector.load %arg5[%c0_77, %c0_78] : memref<256x128xf32, #tpu.memory_space<vmem>>, vector<256x128xf32>
    %cst_79 = arith.constant dense<0.000000e+00> : vector<2x128xf32>
    %171 = tpu.matmul %169, %170, %cst_79 {dimension_numbers = #tpu.dot_dimension_numbers<[1], [0], [0], [1], [0, 0, 1, 1], [], []>} : vector<2x256xf32>, vector<256x128xf32>, vector<2x128xf32> -> vector<2x128xf32>
    %c0_80 = arith.constant 0 : index
    %c0_81 = arith.constant 0 : index
    %172 = vector.load %arg6[%c0_80, %c0_81] : memref<1x128xf32, #tpu.memory_space<vmem>>, vector<1x128xf32>
    %173 = vector.broadcast %172 : vector<1x128xf32> to vector<2x128xf32>
    %174 = arith.addf %171, %173 : vector<2x128xf32>
    %c0_82 = arith.constant 0 : index
    %c0_83 = arith.constant 0 : index
    %175 = vector.load %arg7[%c0_82, %c0_83] : memref<2x128xf32, #tpu.memory_space<vmem>>, vector<2x128xf32>
    tpu.vector_store %arg7[%c0_82, %c0_83], %174 {strides = array<i32>} : memref<2x128xf32, #tpu.memory_space<vmem>>, vector<2x128xf32>,
    return
  }
  func.func @transform_0(%arg0: i32) -> (i32, i32, i32) {
    %c0_i32 = arith.constant 0 : i32
    %c0_i32_0 = arith.constant 0 : i32
    %c0_i32_1 = arith.constant 0 : i32
    return %arg0, %c0_i32, %c0_i32_0 : i32, i32, i32
  }
  func.func @transform_1(%arg0: i32) -> (i32, i32, i32) {
    %c0_i32 = arith.constant 0 : i32
    %c0_i32_0 = arith.constant 0 : i32
    %c0_i32_1 = arith.constant 0 : i32
    %c0_i32_2 = arith.constant 0 : i32
    return %c0_i32, %c0_i32_0, %c0_i32_1 : i32, i32, i32
  }
  func.func @transform_2(%arg0: i32) -> (i32, i32, i32, i32) {
    %c0_i32 = arith.constant 0 : i32
    %c0_i32_0 = arith.constant 0 : i32
    %c0_i32_1 = arith.constant 0 : i32
    %c0_i32_2 = arith.constant 0 : i32
    %c0_i32_3 = arith.constant 0 : i32
    return %c0_i32, %c0_i32_0, %c0_i32_1, %c0_i32_2 : i32, i32, i32, i32
  }
  func.func @transform_3(%arg0: i32) -> (i32, i32, i32) {
    %c0_i32 = arith.constant 0 : i32
    %c0_i32_0 = arith.constant 0 : i32
    %c0_i32_1 = arith.constant 0 : i32
    %c0_i32_2 = arith.constant 0 : i32
    return %c0_i32, %c0_i32_0, %c0_i32_1 : i32, i32, i32
  }
  func.func @transform_4(%arg0: i32) -> (i32, i32) {
    %c0_i32 = arith.constant 0 : i32
    %c0_i32_0 = arith.constant 0 : i32
    %c0_i32_1 = arith.constant 0 : i32
    return %c0_i32, %c0_i32_0 : i32, i32
  }
  func.func @transform_5(%arg0: i32) -> (i32, i32) {
    %c0_i32 = arith.constant 0 : i32
    %c0_i32_0 = arith.constant 0 : i32
    %c0_i32_1 = arith.constant 0 : i32
    return %c0_i32, %c0_i32_0 : i32, i32
  }
  func.func @transform_6(%arg0: i32) -> (i32, i32) {
    %c0_i32 = arith.constant 0 : i32
    %c0_i32_0 = arith.constant 0 : i32
    return %arg0, %c0_i32 : i32, i32
  }
}

</mosaic_0001>

<llo_original>
// kernel: tpu_custom_call.1
$region0: #{tpu_custom_call.1}
  #allocation0 [shape = 'u32[]', space=smem, size = 0x4, offset = 0x4, fixed_abs, tag = 'smem constant byte address 0x4 - core index']
  #allocation1 [shape = 'u32[144,128]{1,0:T(1,128)}', space=vmem, size = 0x12000, scoped, tag = 'internal scratch']
  %s0 = inlined_call_operand.vmem [shape: f32[2,16,4], index: 0, kind: input, shape index: {}]
  %s1 = inlined_call_operand.vmem [shape: f32[3,4,128], index: 1, kind: input, shape index: {}]
  %s2 = inlined_call_operand.hbm [shape: f32[2,3,128,128], index: 2, kind: input, shape index: {}]
  %s3 = inlined_call_operand.vmem [shape: f32[3,3,128], index: 3, kind: input, shape index: {}]
  %s4 = inlined_call_operand.hbm [shape: f32[256,128], index: 4, kind: input, shape index: {}]
  %s5 = inlined_call_operand.vmem [shape: f32[1,128], index: 5, kind: input, shape index: {}]
  %s6 = inlined_call_operand.hbm [shape: f32[2,128], index: 6, kind: output, shape index: {}]
  %s7 = sld [smem:[#allocation0]]
  $region42: #{tpu_custom_call.1} parent=0
    _
  %s9 = ssub.s32 1, %s7
  %s10 = scalar_select 0, %s9, %s7
  $region1: #{tpu_custom_call.1} parent=0
    #allocation2 [shape = 'u8[393216]{0}', space=vmem, size = 0x60000, scoped, tag = 'input window, operand 2, single buffered']
    #allocation3 [shape = 's32[1]{0}', space=sflag, size = 0x4, scoped, tag = 'scoped memory for tpu_custom_call.1']
    #allocation4 [shape = 's32[1]{0}', space=sflag, size = 0x4, scoped, tag = 'scoped memory for tpu_custom_call.1']
    #allocation5 [shape = 'u8[131072]{0}', space=vmem, size = 0x20000, scoped, tag = 'input window, operand 4, single buffered']
    #allocation6 [shape = 's32[1]{0}', space=sflag, size = 0x4, scoped, tag = 'scoped memory for tpu_custom_call.1']
    #allocation7 [shape = 'u8[1024]{0}', space=vmem, size = 0x400, scoped, tag = 'output window, operand 0, single buffered']
    %11 = vsyncpa [#allocation3], 0
    %12 = vsyncpa [#allocation6], 0
    %13 = vsyncpa [#allocation4], 0
    // Predicated region
    $region2: #{tpu_custom_call.1} parent=1 // pred_check
      _
    $region3: #{tpu_custom_call.1} parent=1 // pred_check_branch
      %15 = sbr.rel (0) target = $region5
    $region4: #{tpu_custom_call.1} parent=1 // pred_region
      _
    $region5: #{tpu_custom_call.1} parent=1 // pred_fallthru
      _
    // Predicated region
    $region6: #{tpu_custom_call.1} parent=1 // pred_check
      _
    $region7: #{tpu_custom_call.1} parent=1 // pred_check_branch
      %17 = sbr.rel (0) target = $region9
    $region8: #{tpu_custom_call.1} parent=1 // pred_region
      _
    $region9: #{tpu_custom_call.1} parent=1 // pred_fallthru
      _
    // Predicated region
    $region10: #{tpu_custom_call.1} parent=1 // pred_check
      _
    $region11: #{tpu_custom_call.1} parent=1 // pred_check_branch
      %19 = sbr.rel (0) target = $region13
    $region12: #{tpu_custom_call.1} parent=1 // pred_region
      %s21 = ssub.s32 12288, 12288
      %22 = vsyncadd [#allocation3], %s21
      %s23 = sshll.u32 [#allocation2], 4
      %s24 = int_to_ptr.vmem [resolvable:$true] %s23
      %29 = dma.hbm_to_vmem [thread:$0]  %s2, 12288, %s24, [#allocation3], 128, 128, 8
    $region13: #{tpu_custom_call.1} parent=1 // pred_fallthru
      _
    // Predicated region
    $region14: #{tpu_custom_call.1} parent=1 // pred_check
      _
    $region15: #{tpu_custom_call.1} parent=1 // pred_check_branch
      %31 = sbr.rel (0) target = $region17
    $region16: #{tpu_custom_call.1} parent=1 // pred_region
      _
    $region17: #{tpu_custom_call.1} parent=1 // pred_fallthru
      _
    // Predicated region
    $region18: #{tpu_custom_call.1} parent=1 // pred_check
      _
    $region19: #{tpu_custom_call.1} parent=1 // pred_check_branch
      %33 = sbr.rel (0) target = $region21
    $region20: #{tpu_custom_call.1} parent=1 // pred_region
      %s35 = ssub.s32 4096, 4096
      %36 = vsyncadd [#allocation6], %s35
      %s37 = sshll.u32 [#allocation5], 4
      %s38 = int_to_ptr.vmem [resolvable:$true] %s37
      %43 = dma.hbm_to_vmem [thread:$0]  %s4, 4096, %s38, [#allocation6], 128, 128, 8
    $region21: #{tpu_custom_call.1} parent=1 // pred_fallthru
      _
    // Predicated region
    $region22: #{tpu_custom_call.1} parent=1 // pred_check
      _
    $region23: #{tpu_custom_call.1} parent=1 // pred_check_branch
      %45 = sbr.rel (0) target = $region25
    $region24: #{tpu_custom_call.1} parent=1 // pred_region
      _
    $region25: #{tpu_custom_call.1} parent=1 // pred_fallthru
      _
    // Predicated region
    $region26: #{tpu_custom_call.1} parent=1 // pred_check
      _
    $region27: #{tpu_custom_call.1} parent=1 // pred_check_branch
      %47 = sbr.rel (0) target = $region29
    $region28: #{tpu_custom_call.1} parent=1 // pred_region
      %48 = dma.done [#allocation3], 12288
    $region29: #{tpu_custom_call.1} parent=1 // pred_fallthru
      _
    // Predicated region
    $region30: #{tpu_custom_call.1} parent=1 // pred_check
      _
    $region31: #{tpu_custom_call.1} parent=1 // pred_check_branch
      %50 = sbr.rel (0) target = $region33
    $region32: #{tpu_custom_call.1} parent=1 // pred_region
      %51 = dma.done [#allocation6], 4096
    $region33: #{tpu_custom_call.1} parent=1 // pred_fallthru
      _
    %v52 = vld [vmem:[%s0] sm:$0xff]
    %v53 = vld [vmem:[%s0 + $0x8] sm:$0xff]
    %v54 = vld [vmem:[%s0 + $0x10] sm:$0xff]
    %v55 = vld [vmem:[%s0 + $0x18] sm:$0xff]
    %v56 = vld [vmem:[%s1] sm:$0xf]
    %s57 = scalar_lea.vmem %s1, 4
    %v58 = vld [vmem:[%s57] sm:$0xf]
    %s59 = scalar_lea.vmem %s1, 8
    %v60 = vld [vmem:[%s59] sm:$0xf]
    %v61 = vld [vmem:[%s3] sm:$0x7]
    %vm66 = vcmask 1040384
    %v67 = vrot.slane %v52, 7
    %v68 = vrot.slane %v53, 7
    %v69 = vsel %vm66, %v67, %v68
    %v70 = vrot.slane %v54, 7
    %v71 = vrot.slane %v55, 7
    %v72 = vsel %vm66, %v70, %v71
    %v75 = vsel %vm66, 0.0, %v67
    %v76 = vsel %vm66, 0.0, %v70
    %vm77 = vcmask 1046528
    %v78 = vrot.slane %v52, 1
    %v79 = vrot.slane %v53, 1
    %v80 = vsel %vm77, %v78, %v79
    %v81 = vrot.slane %v54, 1
    %v82 = vrot.slane %v55, 1
    %v83 = vsel %vm77, %v81, %v82
    %v86 = vsel %vm77, %v79, 0.0
    %v87 = vsel %vm77, %v82, 0.0
    %vm88 = vcmask 31744
    %v89 = vsel %vm88, %v52, 0
    %v91 = vsel %vm88, %v53, 0
    %v93 = vsel %vm88, %v54, 0
    %v95 = vsel %vm88, %v55, 0
    %vm97 = vcmask 1043456
    %v99 = vsel %vm97, %v58, 0
    %101 = vmatprep.subr.mxu0 0.0
    %102 = vmatpush1.msra.mxu0 %v99
    %103 = vmatprep.subr.mxu0 0.0
    %104 = vmatpush1.msra.mxu0 0.0
    %105 = vmatprep.subr.mxu0 0.0
    %106 = vmatpush1.msra.mxu0 0.0
    %107 = vmatprep.subr.mxu0 0.0
    %108 = vmatpush1.msra.mxu0 0.0
    %109 = vmatprep.subr.mxu0 0.0
    %110 = vmatpush1.msra.mxu0 0.0
    %111 = vmatprep.subr.mxu0 0.0
    %112 = vmatpush1.msra.mxu0 0.0
    %113 = vmatprep.subr.mxu0 0.0
    %114 = vmatpush1.msra.mxu0 0.0
    %115 = vmatprep.subr.mxu0 0.0
    %116 = vmatpush1.msra.mxu0 0.0
    %117 = vmatprep.subr.mxu0 0.0
    %118 = vmatpush1.msra.mxu0 0.0
    %119 = vmatprep.subr.mxu0 0.0
    %120 = vmatpush1.msra.mxu0 0.0
    %121 = vmatprep.subr.mxu0 0.0
    %122 = vmatpush1.msra.mxu0 0.0
    %123 = vmatprep.subr.mxu0 0.0
    %124 = vmatpush1.msra.mxu0 0.0
    %125 = vmatprep.subr.mxu0 0.0
    %126 = vmatpush1.msra.mxu0 0.0
    %127 = vmatprep.subr.mxu0 0.0
    %128 = vmatpush1.msra.mxu0 0.0
    %129 = vmatprep.subr.mxu0 0.0
    %130 = vmatpush1.msra.mxu0 0.0
    %131 = vmatprep.subr.mxu0 0.0
    %132 = vmatpush1.msra.mxu0 0.0
    %133 = vmatprep.subr.mxu0 0.0
    %134 = vmatpush1.msra.mxu0 0.0
    %135 = vmatprep.subr.mxu0 0.0
    %136 = vmatpush1.msra.mxu0 0.0
    %137 = vmatprep.subr.mxu0 0.0
    %138 = vmatpush1.msra.mxu0 0.0
    %139 = vmatprep.subr.mxu0 0.0
    %140 = vmatpush1.msra.mxu0 0.0
    %141 = vmatprep.subr.mxu0 0.0
    %142 = vmatpush1.msra.mxu0 0.0
    %143 = vmatprep.subr.mxu0 0.0
    %144 = vmatpush1.msra.mxu0 0.0
    %145 = vmatprep.subr.mxu0 0.0
    %146 = vmatpush1.msra.mxu0 0.0
    %147 = vmatprep.subr.mxu0 0.0
    %148 = vmatpush1.msra.mxu0 0.0
    %149 = vmatprep.subr.mxu0 0.0
    %150 = vmatpush1.msra.mxu0 0.0
    %151 = vmatprep.subr.mxu0 0.0
    %152 = vmatpush1.msra.mxu0 0.0
    %153 = vmatprep.subr.mxu0 0.0
    %154 = vmatpush1.msra.mxu0 0.0
    %155 = vmatprep.subr.mxu0 0.0
    %156 = vmatpush1.msra.mxu0 0.0
    %157 = vmatprep.subr.mxu0 0.0
    %158 = vmatpush1.msra.mxu0 0.0
    %159 = vmatprep.subr.mxu0 0.0
    %160 = vmatpush1.msra.mxu0 0.0
    %161 = vmatprep.subr.mxu0 0.0
    %162 = vmatpush1.msra.mxu0 0.0
    %163 = vmatprep.subr.mxu0 0.0
    %164 = vmatpush1.msra.mxu0 0.0
    %165 = vmatprep.mubr.f32.mxu0 0.0
    %166 = vmatmul.mubr.f32.gmra.mrb[0].mxu0 %v89
    %v167 = vpop.f32.mrb[0].mxu0
    %v168 = vadd.f32 0.0, %v167
    %v169 = vpop.f32.mrb[0].mxu0
    %170 = vmatprep.mubr.f32.mxu0 0.0
    %171 = vmatmul.mubr.f32.gmra.mrb[0].mxu0 %v91
    %v172 = vpop.f32.mrb[0].mxu0
    %v173 = vadd.f32 0.0, %v172
    %v174 = vpop.f32.mrb[0].mxu0
    %175 = vmatprep.mubr.f32.mxu0 0.0
    %176 = vmatmul.mubr.f32.gmra.mrb[0].mxu0 %v93
    %v177 = vpop.f32.mrb[0].mxu0
    %v178 = vadd.f32 0.0, %v177
    %v179 = vpop.f32.mrb[0].mxu0
    %180 = vmatprep.mubr.f32.mxu0 0.0
    %181 = vmatmul.mubr.f32.gmra.mrb[0].mxu0 %v95
    %v182 = vpop.f32.mrb[0].mxu0
    %v183 = vadd.f32 0.0, %v182
    %v184 = vpop.f32.mrb[0].mxu0
    %185 = vdwg.mxu0
    %v187 = vsel %vm88, %v75, 0
    %v189 = vsel %vm88, %v69, 0
    %v192 = vsel %vm88, %v76, 0
    %v194 = vsel %vm88, %v72, 0
    %v197 = vsel %vm97, %v56, 0
    %199 = vmatprep.subr.mxu0 0.0
    %200 = vmatpush1.msra.mxu0 %v197
    %201 = vmatprep.subr.mxu0 0.0
    %202 = vmatpush1.msra.mxu0 0.0
    %203 = vmatprep.subr.mxu0 0.0
    %204 = vmatpush1.msra.mxu0 0.0
    %205 = vmatprep.subr.mxu0 0.0
    %206 = vmatpush1.msra.mxu0 0.0
    %207 = vmatprep.subr.mxu0 0.0
    %208 = vmatpush1.msra.mxu0 0.0
    %209 = vmatprep.subr.mxu0 0.0
    %210 = vmatpush1.msra.mxu0 0.0
    %211 = vmatprep.subr.mxu0 0.0
    %212 = vmatpush1.msra.mxu0 0.0
    %213 = vmatprep.subr.mxu0 0.0
    %214 = vmatpush1.msra.mxu0 0.0
    %215 = vmatprep.subr.mxu0 0.0
    %216 = vmatpush1.msra.mxu0 0.0
    %217 = vmatprep.subr.mxu0 0.0
    %218 = vmatpush1.msra.mxu0 0.0
    %219 = vmatprep.subr.mxu0 0.0
    %220 = vmatpush1.msra.mxu0 0.0
    %221 = vmatprep.subr.mxu0 0.0
    %222 = vmatpush1.msra.mxu0 0.0
    %223 = vmatprep.subr.mxu0 0.0
    %224 = vmatpush1.msra.mxu0 0.0
    %225 = vmatprep.subr.mxu0 0.0
    %226 = vmatpush1.msra.mxu0 0.0
    %227 = vmatprep.subr.mxu0 0.0
    %228 = vmatpush1.msra.mxu0 0.0
    %229 = vmatprep.subr.mxu0 0.0
    %230 = vmatpush1.msra.mxu0 0.0
    %231 = vmatprep.subr.mxu0 0.0
    %232 = vmatpush1.msra.mxu0 0.0
    %233 = vmatprep.subr.mxu0 0.0
    %234 = vmatpush1.msra.mxu0 0.0
    %235 = vmatprep.subr.mxu0 0.0
    %236 = vmatpush1.msra.mxu0 0.0
    %237 = vmatprep.subr.mxu0 0.0
    %238 = vmatpush1.msra.mxu0 0.0
    %239 = vmatprep.subr.mxu0 0.0
    %240 = vmatpush1.msra.mxu0 0.0
    %241 = vmatprep.subr.mxu0 0.0
    %242 = vmatpush1.msra.mxu0 0.0
    %243 = vmatprep.subr.mxu0 0.0
    %244 = vmatpush1.msra.mxu0 0.0
    %245 = vmatprep.subr.mxu0 0.0
    %246 = vmatpush1.msra.mxu0 0.0
    %247 = vmatprep.subr.mxu0 0.0
    %248 = vmatpush1.msra.mxu0 0.0
    %249 = vmatprep.subr.mxu0 0.0
    %250 = vmatpush1.msra.mxu0 0.0
    %251 = vmatprep.subr.mxu0 0.0
    %252 = vmatpush1.msra.mxu0 0.0
    %253 = vmatprep.subr.mxu0 0.0
    %254 = vmatpush1.msra.mxu0 0.0
    %255 = vmatprep.subr.mxu0 0.0
    %256 = vmatpush1.msra.mxu0 0.0
    %257 = vmatprep.subr.mxu0 0.0
    %258 = vmatpush1.msra.mxu0 0.0
    %259 = vmatprep.subr.mxu0 0.0
    %260 = vmatpush1.msra.mxu0 0.0
    %261 = vmatprep.subr.mxu0 0.0
    %262 = vmatpush1.msra.mxu0 0.0
    %263 = vmatprep.mubr.f32.mxu0 0.0
    %264 = vmatmul.mubr.f32.gmra.mrb[0].mxu0 %v187
    %v265 = vpop.f32.mrb[0].mxu0
    %v266 = vadd.f32 %v168, %v265
    %v267 = vpop.f32.mrb[0].mxu0
    %268 = vmatprep.mubr.f32.mxu0 0.0
    %269 = vmatmul.mubr.f32.gmra.mrb[0].mxu0 %v189
    %v270 = vpop.f32.mrb[0].mxu0
    %v271 = vadd.f32 %v173, %v270
    %v272 = vpop.f32.mrb[0].mxu0
    %273 = vmatprep.mubr.f32.mxu0 0.0
    %274 = vmatmul.mubr.f32.gmra.mrb[0].mxu0 %v192
    %v275 = vpop.f32.mrb[0].mxu0
    %v276 = vadd.f32 %v178, %v275
    %v277 = vpop.f32.mrb[0].mxu0
    %278 = vmatprep.mubr.f32.mxu0 0.0
    %279 = vmatmul.mubr.f32.gmra.mrb[0].mxu0 %v194
    %v280 = vpop.f32.mrb[0].mxu0
    %v281 = vadd.f32 %v183, %v280
    %v282 = vpop.f32.mrb[0].mxu0
    %283 = vdwg.mxu0
    %v284 = vsel %vm88, %v80, 0
    %v287 = vsel %vm88, %v86, 0
    %v289 = vsel %vm88, %v83, 0
    %v292 = vsel %vm88, %v87, 0
    %v295 = vsel %vm97, %v60, 0
    %297 = vmatprep.subr.mxu0 0.0
    %298 = vmatpush1.msra.mxu0 %v295
    %299 = vmatprep.subr.mxu0 0.0
    %300 = vmatpush1.msra.mxu0 0.0
    %301 = vmatprep.subr.mxu0 0.0
    %302 = vmatpush1.msra.mxu0 0.0
    %303 = vmatprep.subr.mxu0 0.0
    %304 = vmatpush1.msra.mxu0 0.0
    %305 = vmatprep.subr.mxu0 0.0
    %306 = vmatpush1.msra.mxu0 0.0
    %307 = vmatprep.subr.mxu0 0.0
    %308 = vmatpush1.msra.mxu0 0.0
    %309 = vmatprep.subr.mxu0 0.0
    %310 = vmatpush1.msra.mxu0 0.0
    %311 = vmatprep.subr.mxu0 0.0
    %312 = vmatpush1.msra.mxu0 0.0
    %313 = vmatprep.subr.mxu0 0.0
    %314 = vmatpush1.msra.mxu0 0.0
    %315 = vmatprep.subr.mxu0 0.0
    %316 = vmatpush1.msra.mxu0 0.0
    %317 = vmatprep.subr.mxu0 0.0
    %318 = vmatpush1.msra.mxu0 0.0
    %319 = vmatprep.subr.mxu0 0.0
    %320 = vmatpush1.msra.mxu0 0.0
    %321 = vmatprep.subr.mxu0 0.0
    %322 = vmatpush1.msra.mxu0 0.0
    %323 = vmatprep.subr.mxu0 0.0
    %324 = vmatpush1.msra.mxu0 0.0
    %325 = vmatprep.subr.mxu0 0.0
    %326 = vmatpush1.msra.mxu0 0.0
    %327 = vmatprep.subr.mxu0 0.0
    %328 = vmatpush1.msra.mxu0 0.0
    %329 = vmatprep.subr.mxu0 0.0
    %330 = vmatpush1.msra.mxu0 0.0
    %331 = vmatprep.subr.mxu0 0.0
    %332 = vmatpush1.msra.mxu0 0.0
    %333 = vmatprep.subr.mxu0 0.0
    %334 = vmatpush1.msra.mxu0 0.0
    %335 = vmatprep.subr.mxu0 0.0
    %336 = vmatpush1.msra.mxu0 0.0
    %337 = vmatprep.subr.mxu0 0.0
    %338 = vmatpush1.msra.mxu0 0.0
    %339 = vmatprep.subr.mxu0 0.0
    %340 = vmatpush1.msra.mxu0 0.0
    %341 = vmatprep.subr.mxu0 0.0
    %342 = vmatpush1.msra.mxu0 0.0
    %343 = vmatprep.subr.mxu0 0.0
    %344 = vmatpush1.msra.mxu0 0.0
    %345 = vmatprep.subr.mxu0 0.0
    %346 = vmatpush1.msra.mxu0 0.0
    %347 = vmatprep.subr.mxu0 0.0
    %348 = vmatpush1.msra.mxu0 0.0
    %349 = vmatprep.subr.mxu0 0.0
    %350 = vmatpush1.msra.mxu0 0.0
    %351 = vmatprep.subr.mxu0 0.0
    %352 = vmatpush1.msra.mxu0 0.0
    %353 = vmatprep.subr.mxu0 0.0
    %354 = vmatpush1.msra.mxu0 0.0
    %355 = vmatprep.subr.mxu0 0.0
    %356 = vmatpush1.msra.mxu0 0.0
    %357 = vmatprep.subr.mxu0 0.0
    %358 = vmatpush1.msra.mxu0 0.0
    %359 = vmatprep.subr.mxu0 0.0
    %360 = vmatpush1.msra.mxu0 0.0
    %361 = vmatprep.mubr.f32.mxu0 0.0
    %362 = vmatmul.mubr.f32.gmra.mrb[0].mxu0 %v284
    %v363 = vpop.f32.mrb[0].mxu0
    %v364 = vadd.f32 0.0, %v363
    %v365 = vpop.f32.mrb[0].mxu0
    %366 = vmatprep.mubr.f32.mxu0 0.0
    %367 = vmatmul.mubr.f32.gmra.mrb[0].mxu0 %v287
    %v368 = vpop.f32.mrb[0].mxu0
    %v369 = vadd.f32 0.0, %v368
    %v370 = vpop.f32.mrb[0].mxu0
    %371 = vmatprep.mubr.f32.mxu0 0.0
    %372 = vmatmul.mubr.f32.gmra.mrb[0].mxu0 %v289
    %v373 = vpop.f32.mrb[0].mxu0
    %v374 = vadd.f32 0.0, %v373
    %v375 = vpop.f32.mrb[0].mxu0
    %376 = vmatprep.mubr.f32.mxu0 0.0
    %377 = vmatmul.mubr.f32.gmra.mrb[0].mxu0 %v292
    %v378 = vpop.f32.mrb[0].mxu0
    %v379 = vadd.f32 0.0, %v378
    %v380 = vpop.f32.mrb[0].mxu0
    %381 = vdwg.mxu0
    %v382 = vadd.f32 %v266, %v364
    %v383 = vadd.f32 %v271, %v369
    %v384 = vadd.f32 %v276, %v374
    %v385 = vadd.f32 %v281, %v379
    %v386 = vlaneseq
    %v387 = vshrl.u32 %v386, 7
    %v388 = vsub.s32 0, %v387
    %v389 = vrot.slane %v61, %v388
    %v390 = vadd.f32 %v382, %v389
    %v391 = vadd.f32 %v383, %v389
    %v392 = vadd.f32 %v384, %v389
    %v393 = vadd.f32 %v385, %v389
    %v394 = vadd.f32 %v390, %v391
    %v395 = vrot.slane %v394, 4
    %v396 = vadd.f32 %v394, %v395
    %v397 = vrot.slane %v396, 2
    %v398 = vadd.f32 %v396, %v397
    %v399 = vrot.slane %v398, 1
    %v400 = vadd.f32 %v398, %v399
    %v401 = vadd.f32 %v392, %v393
    %v402 = vrot.slane %v401, 4
    %v403 = vadd.f32 %v401, %v402
    %v404 = vrot.slane %v403, 2
    %v405 = vadd.f32 %v403, %v404
    %v406 = vrot.slane %v405, 1
    %v407 = vadd.f32 %v405, %v406
    %v408 = vrcp.pop 16.0
    %v409 = vmul.f32 %v400, %v408
    %v410 = vmul.f32 %v407, %v408
    %v411 = vsub.f32 %v390, %v409
    %v412 = vsub.f32 %v391, %v409
    %v413 = vsub.f32 %v392, %v410
    %v414 = vsub.f32 %v393, %v410
    %v415 = vmul.f32 %v411, %v411
    %v416 = vmul.f32 %v412, %v412
    %v417 = vmul.f32 %v413, %v413
    %v418 = vmul.f32 %v414, %v414
    %v419 = vadd.f32 %v415, %v416
    %v420 = vrot.slane %v419, 4
    %v421 = vadd.f32 %v419, %v420
    %v422 = vrot.slane %v421, 2
    %v423 = vadd.f32 %v421, %v422
    %v424 = vrot.slane %v423, 1
    %v425 = vadd.f32 %v423, %v424
    %v426 = vadd.f32 %v417, %v418
    %v427 = vrot.slane %v426, 4
    %v428 = vadd.f32 %v426, %v427
    %v429 = vrot.slane %v428, 2
    %v430 = vadd.f32 %v428, %v429
    %v431 = vrot.slane %v430, 1
    %v432 = vadd.f32 %v430, %v431
    %v433 = vmul.f32 %v425, %v408
    %v434 = vmul.f32 %v432, %v408
    %v435 = vadd.f32 %v433, 1e-05
    %v436 = vadd.f32 %v434, 1e-05
    %v437 = vrsqrt.pop %v435
    %v438 = vrsqrt.pop %v436
    %v439 = vmul.f32 %v411, %v437
    %v440 = vmul.f32 %v412, %v437
    %v441 = vmul.f32 %v413, %v438
    %v442 = vmul.f32 %v414, %v438
    %v443 = vlaneseq
    %v444 = vshrl.u32 %v443, 7
    %v445 = vsub.s32 1, %v444
    %v446 = vrot.slane %v61, %v445
    %v447 = vmul.f32 %v439, %v446
    %v448 = vmul.f32 %v440, %v446
    %v449 = vmul.f32 %v441, %v446
    %v450 = vmul.f32 %v442, %v446
    %v451 = vlaneseq
    %v452 = vshrl.u32 %v451, 7
    %v453 = vsub.s32 2, %v452
    %v454 = vrot.slane %v61, %v453
    %v455 = vadd.f32 %v447, %v454
    %v456 = vadd.f32 %v448, %v454
    %v457 = vadd.f32 %v449, %v454
    %v458 = vadd.f32 %v450, %v454
    %v459 = vmax.f32 %v455, 0.0
    %v460 = vmax.f32 %v456, 0.0
    %v461 = vmax.f32 %v457, 0.0
    %v462 = vmax.f32 %v458, 0.0
    %v467 = vcombine.high %v459, %v459
    %v469 = vunpack.c.l.s4 1983009808
    %v470 = vunpack.c.0.s8 %v469
    %v471 = vlaneseq
    %v472 = vshrl.u32 %v471, 7
    %v473 = vsub.s32 %v470, %v472
    %v474 = vrot.slane %v459, %v473
    %v476 = vunpack.c.l.s4 1983009808
    %v477 = vunpack.c.0.s8 %v476
    %v478 = vlaneseq
    %v479 = vshrl.u32 %v478, 7
    %v480 = vsub.s32 %v477, %v479
    %v481 = vrot.slane %v467, %v480
    %v482 = vcombine.high %v474, %v474
    %v483 = vcombine.high %v481, %v481
    %v484 = vcombine.high %v460, %v460
    %v486 = vunpack.c.l.s4 1983009808
    %v487 = vunpack.c.0.s8 %v486
    %v488 = vlaneseq
    %v489 = vshrl.u32 %v488, 7
    %v490 = vsub.s32 %v487, %v489
    %v491 = vrot.slane %v460, %v490
    %v493 = vunpack.c.l.s4 1983009808
    %v494 = vunpack.c.0.s8 %v493
    %v495 = vlaneseq
    %v496 = vshrl.u32 %v495, 7
    %v497 = vsub.s32 %v494, %v496
    %v498 = vrot.slane %v484, %v497
    %v499 = vcombine.high %v491, %v491
    %v500 = vcombine.high %v498, %v498
    %v501 = vcombine.high %v461, %v461
    %v503 = vunpack.c.l.s4 1983009808
    %v504 = vunpack.c.0.s8 %v503
    %v505 = vlaneseq
    %v506 = vshrl.u32 %v505, 7
    %v507 = vsub.s32 %v504, %v506
    %v508 = vrot.slane %v461, %v507
    %v510 = vunpack.c.l.s4 1983009808
    %v511 = vunpack.c.0.s8 %v510
    %v512 = vlaneseq
    %v513 = vshrl.u32 %v512, 7
    %v514 = vsub.s32 %v511, %v513
    %v515 = vrot.slane %v501, %v514
    %v516 = vcombine.high %v508, %v508
    %v517 = vcombine.high %v515, %v515
    %v518 = vcombine.high %v462, %v462
    %v520 = vunpack.c.l.s4 1983009808
    %v521 = vunpack.c.0.s8 %v520
    %v522 = vlaneseq
    %v523 = vshrl.u32 %v522, 7
    %v524 = vsub.s32 %v521, %v523
    %v525 = vrot.slane %v462, %v524
    %v527 = vunpack.c.l.s4 1983009808
    %v528 = vunpack.c.0.s8 %v527
    %v529 = vlaneseq
    %v530 = vshrl.u32 %v529, 7
    %v531 = vsub.s32 %v528, %v530
    %v532 = vrot.slane %v518, %v531
    %v533 = vcombine.high %v525, %v525
    %v534 = vcombine.high %v532, %v532
    %vm551 = vcmask 1041408
    %v552 = vsel %vm551, %v474, 0.0
    %v553 = vrot.slane %v552, 4
    %v554 = vadd.f32 %v552, %v553
    %v555 = vrot.slane %v554, 2
    %v556 = vadd.f32 %v554, %v555
    %v557 = vrot.slane %v556, 1
    %v558 = vadd.f32 %v556, %v557
    %v559 = vsel %vm551, %v482, 0.0
    %v560 = vrot.slane %v559, 4
    %v561 = vadd.f32 %v559, %v560
    %v562 = vrot.slane %v561, 2
    %v563 = vadd.f32 %v561, %v562
    %v564 = vrot.slane %v563, 1
    %v565 = vadd.f32 %v563, %v564
    %v566 = vsel %vm551, %v481, 0.0
    %v567 = vrot.slane %v566, 4
    %v568 = vadd.f32 %v566, %v567
    %v569 = vrot.slane %v568, 2
    %v570 = vadd.f32 %v568, %v569
    %v571 = vrot.slane %v570, 1
    %v572 = vadd.f32 %v570, %v571
    %v573 = vsel %vm551, %v483, 0.0
    %v574 = vrot.slane %v573, 4
    %v575 = vadd.f32 %v573, %v574
    %v576 = vrot.slane %v575, 2
    %v577 = vadd.f32 %v575, %v576
    %v578 = vrot.slane %v577, 1
    %v579 = vadd.f32 %v577, %v578
    %v580 = vsel %vm551, %v491, 0.0
    %v581 = vrot.slane %v580, 4
    %v582 = vadd.f32 %v580, %v581
    %v583 = vrot.slane %v582, 2
    %v584 = vadd.f32 %v582, %v583
    %v585 = vrot.slane %v584, 1
    %v586 = vadd.f32 %v584, %v585
    %v587 = vsel %vm551, %v499, 0.0
    %v588 = vrot.slane %v587, 4
    %v589 = vadd.f32 %v587, %v588
    %v590 = vrot.slane %v589, 2
    %v591 = vadd.f32 %v589, %v590
    %v592 = vrot.slane %v591, 1
    %v593 = vadd.f32 %v591, %v592
    %v594 = vsel %vm551, %v498, 0.0
    %v595 = vrot.slane %v594, 4
    %v596 = vadd.f32 %v594, %v595
    %v597 = vrot.slane %v596, 2
    %v598 = vadd.f32 %v596, %v597
    %v599 = vrot.slane %v598, 1
    %v600 = vadd.f32 %v598, %v599
    %v601 = vsel %vm551, %v500, 0.0
    %v602 = vrot.slane %v601, 4
    %v603 = vadd.f32 %v601, %v602
    %v604 = vrot.slane %v603, 2
    %v605 = vadd.f32 %v603, %v604
    %v606 = vrot.slane %v605, 1
    %v607 = vadd.f32 %v605, %v606
    %v608 = vsel %vm551, %v508, 0.0
    %v609 = vrot.slane %v608, 4
    %v610 = vadd.f32 %v608, %v609
    %v611 = vrot.slane %v610, 2
    %v612 = vadd.f32 %v610, %v611
    %v613 = vrot.slane %v612, 1
    %v614 = vadd.f32 %v612, %v613
    %v615 = vsel %vm551, %v516, 0.0
    %v616 = vrot.slane %v615, 4
    %v617 = vadd.f32 %v615, %v616
    %v618 = vrot.slane %v617, 2
    %v619 = vadd.f32 %v617, %v618
    %v620 = vrot.slane %v619, 1
    %v621 = vadd.f32 %v619, %v620
    %v622 = vsel %vm551, %v515, 0.0
    %v623 = vrot.slane %v622, 4
    %v624 = vadd.f32 %v622, %v623
    %v625 = vrot.slane %v624, 2
    %v626 = vadd.f32 %v624, %v625
    %v627 = vrot.slane %v626, 1
    %v628 = vadd.f32 %v626, %v627
    %v629 = vsel %vm551, %v517, 0.0
    %v630 = vrot.slane %v629, 4
    %v631 = vadd.f32 %v629, %v630
    %v632 = vrot.slane %v631, 2
    %v633 = vadd.f32 %v631, %v632
    %v634 = vrot.slane %v633, 1
    %v635 = vadd.f32 %v633, %v634
    %v636 = vsel %vm551, %v525, 0.0
    %v637 = vrot.slane %v636, 4
    %v638 = vadd.f32 %v636, %v637
    %v639 = vrot.slane %v638, 2
    %v640 = vadd.f32 %v638, %v639
    %v641 = vrot.slane %v640, 1
    %v642 = vadd.f32 %v640, %v641
    %v643 = vsel %vm551, %v533, 0.0
    %v644 = vrot.slane %v643, 4
    %v645 = vadd.f32 %v643, %v644
    %v646 = vrot.slane %v645, 2
    %v647 = vadd.f32 %v645, %v646
    %v648 = vrot.slane %v647, 1
    %v649 = vadd.f32 %v647, %v648
    %v650 = vsel %vm551, %v532, 0.0
    %v651 = vrot.slane %v650, 4
    %v652 = vadd.f32 %v650, %v651
    %v653 = vrot.slane %v652, 2
    %v654 = vadd.f32 %v652, %v653
    %v655 = vrot.slane %v654, 1
    %v656 = vadd.f32 %v654, %v655
    %v657 = vsel %vm551, %v534, 0.0
    %v658 = vrot.slane %v657, 4
    %v659 = vadd.f32 %v657, %v658
    %v660 = vrot.slane %v659, 2
    %v661 = vadd.f32 %v659, %v660
    %v662 = vrot.slane %v661, 1
    %v663 = vadd.f32 %v661, %v662
    %v664 = vrcp.pop 2.0
    %v665 = vmul.f32 %v558, %v664
    %v666 = vmul.f32 %v565, %v664
    %v667 = vmul.f32 %v572, %v664
    %v668 = vmul.f32 %v579, %v664
    %v669 = vmul.f32 %v586, %v664
    %v670 = vmul.f32 %v593, %v664
    %v671 = vmul.f32 %v600, %v664
    %v672 = vmul.f32 %v607, %v664
    %v673 = vmul.f32 %v614, %v664
    %v674 = vmul.f32 %v621, %v664
    %v675 = vmul.f32 %v628, %v664
    %v676 = vmul.f32 %v635, %v664
    %v677 = vmul.f32 %v642, %v664
    %v678 = vmul.f32 %v649, %v664
    %v679 = vmul.f32 %v656, %v664
    %v680 = vmul.f32 %v663, %v664
    %v681 = vld [vmem:[#allocation2] sm:$0xff]
    %v682 = vld [vmem:[#allocation2 + $0x8] sm:$0xff]
    %v683 = vld [vmem:[#allocation2 + $0x10] sm:$0xff]
    %v684 = vld [vmem:[#allocation2 + $0x18] sm:$0xff]
    %v685 = vld [vmem:[#allocation2 + $0x20] sm:$0xff]
    %v686 = vld [vmem:[#allocation2 + $0x28] sm:$0xff]
    %v687 = vld [vmem:[#allocation2 + $0x30] sm:$0xff]
    %v688 = vld [vmem:[#allocation2 + $0x38] sm:$0xff]
    %v689 = vld [vmem:[#allocation2 + $0x40] sm:$0xff]
    %v690 = vld [vmem:[#allocation2 + $0x48] sm:$0xff]
    %v691 = vld [vmem:[#allocation2 + $0x50] sm:$0xff]
    %v692 = vld [vmem:[#allocation2 + $0x58] sm:$0xff]
    %v693 = vld [vmem:[#allocation2 + $0x60] sm:$0xff]
    %v694 = vld [vmem:[#allocation2 + $0x68] sm:$0xff]
    %v695 = vld [vmem:[#allocation2 + $0x70] sm:$0xff]
    %v696 = vld [vmem:[#allocation2 + $0x78] sm:$0xff]
    %s697 = scalar_lea.vmem [#allocation2], 128
    %v698 = vld [vmem:[%s697] sm:$0xff]
    %v699 = vld [vmem:[%s697 + $0x8] sm:$0xff]
    %v700 = vld [vmem:[%s697 + $0x10] sm:$0xff]
    %v701 = vld [vmem:[%s697 + $0x18] sm:$0xff]
    %v702 = vld [vmem:[%s697 + $0x20] sm:$0xff]
    %v703 = vld [vmem:[%s697 + $0x28] sm:$0xff]
    %v704 = vld [vmem:[%s697 + $0x30] sm:$0xff]
    %v705 = vld [vmem:[%s697 + $0x38] sm:$0xff]
    %v706 = vld [vmem:[%s697 + $0x40] sm:$0xff]
    %v707 = vld [vmem:[%s697 + $0x48] sm:$0xff]
    %v708 = vld [vmem:[%s697 + $0x50] sm:$0xff]
    %v709 = vld [vmem:[%s697 + $0x58] sm:$0xff]
    %v710 = vld [vmem:[%s697 + $0x60] sm:$0xff]
    %v711 = vld [vmem:[%s697 + $0x68] sm:$0xff]
    %v712 = vld [vmem:[%s697 + $0x70] sm:$0xff]
    %v713 = vld [vmem:[%s697 + $0x78] sm:$0xff]
    %s714 = scalar_lea.vmem [#allocation2], 256
    %v715 = vld [vmem:[%s714] sm:$0xff]
    %v716 = vld [vmem:[%s714 + $0x8] sm:$0xff]
    %v717 = vld [vmem:[%s714 + $0x10] sm:$0xff]
    %v718 = vld [vmem:[%s714 + $0x18] sm:$0xff]
    %v719 = vld [vmem:[%s714 + $0x20] sm:$0xff]
    %v720 = vld [vmem:[%s714 + $0x28] sm:$0xff]
    %v721 = vld [vmem:[%s714 + $0x30] sm:$0xff]
    %v722 = vld [vmem:[%s714 + $0x38] sm:$0xff]
    %v723 = vld [vmem:[%s714 + $0x40] sm:$0xff]
    %v724 = vld [vmem:[%s714 + $0x48] sm:$0xff]
    %v725 = vld [vmem:[%s714 + $0x50] sm:$0xff]
    %v726 = vld [vmem:[%s714 + $0x58] sm:$0xff]
    %v727 = vld [vmem:[%s714 + $0x60] sm:$0xff]
    %v728 = vld [vmem:[%s714 + $0x68] sm:$0xff]
    %v729 = vld [vmem:[%s714 + $0x70] sm:$0xff]
    %v730 = vld [vmem:[%s714 + $0x78] sm:$0xff]
    %s731 = scalar_lea.vmem %s3, 4
    %v732 = vld [vmem:[%s731] sm:$0x7]
    %vm747 = vcmask 1042434
    %v748 = vsel %vm747, %v666, %v665
    %vm749 = vcmask 1043459
    %v750 = vsel %vm749, %v667, %v748
    %vm751 = vcmask 1044484
    %v752 = vsel %vm751, %v668, %v750
    %vm753 = vcmask 1045509
    %v754 = vsel %vm753, %v669, %v752
    %vm755 = vcmask 1046534
    %v756 = vsel %vm755, %v670, %v754
    %vm757 = vcmask 1047559
    %v758 = vsel %vm757, %v671, %v756
    %v759 = vsel %vm747, %v674, %v673
    %v760 = vsel %vm749, %v675, %v759
    %v761 = vsel %vm751, %v676, %v760
    %v762 = vsel %vm753, %v677, %v761
    %v763 = vsel %vm755, %v678, %v762
    %v764 = vsel %vm757, %v679, %v763
    %v767 = vsel %vm66, 0.0, %v758
    %v768 = vsel %vm66, 0.0, %v764
    %vm771 = vcmask 1041409
    %v772 = vsel %vm771, %v667, %v666
    %v773 = vsel %vm747, %v668, %v772
    %v774 = vsel %vm749, %v669, %v773
    %v775 = vsel %vm751, %v670, %v774
    %v776 = vsel %vm753, %v671, %v775
    %v777 = vsel %vm755, %v672, %v776
    %v778 = vsel %vm771, %v675, %v674
    %v779 = vsel %vm747, %v676, %v778
    %v780 = vsel %vm749, %v677, %v779
    %v781 = vsel %vm751, %v678, %v780
    %v782 = vsel %vm753, %v679, %v781
    %v783 = vsel %vm755, %v680, %v782
    %v786 = vsel %vm77, %v777, 0.0
    %v787 = vsel %vm77, %v783, 0.0
    %v788 = vsel %vm771, %v666, %v665
    %v789 = vsel %vm747, %v667, %v788
    %v790 = vsel %vm749, %v668, %v789
    %v791 = vsel %vm751, %v669, %v790
    %v792 = vsel %vm753, %v670, %v791
    %v793 = vsel %vm755, %v671, %v792
    %v794 = vsel %vm757, %v672, %v793
    %v795 = vsel %vm771, %v674, %v673
    %v796 = vsel %vm747, %v675, %v795
    %v797 = vsel %vm749, %v676, %v796
    %v798 = vsel %vm751, %v677, %v797
    %v799 = vsel %vm753, %v678, %v798
    %v800 = vsel %vm755, %v679, %v799
    %v801 = vsel %vm757, %v680, %v800
    %804 = vmatprep.subr.mxu0 0.0
    %805 = vmatpush1.msra.mxu0 %v698
    %806 = vmatprep.subr.mxu0 0.0
    %807 = vmatpush1.msra.mxu0 %v699
    %808 = vmatprep.subr.mxu0 0.0
    %809 = vmatpush1.msra.mxu0 %v700
    %810 = vmatprep.subr.mxu0 0.0
    %811 = vmatpush1.msra.mxu0 %v701
    %812 = vmatprep.subr.mxu0 0.0
    %813 = vmatpush1.msra.mxu0 %v702
    %814 = vmatprep.subr.mxu0 0.0
    %815 = vmatpush1.msra.mxu0 %v703
    %816 = vmatprep.subr.mxu0 0.0
    %817 = vmatpush1.msra.mxu0 %v704
    %818 = vmatprep.subr.mxu0 0.0
    %819 = vmatpush1.msra.mxu0 %v705
    %820 = vmatprep.subr.mxu0 0.0
    %821 = vmatpush1.msra.mxu0 %v706
    %822 = vmatprep.subr.mxu0 0.0
    %823 = vmatpush1.msra.mxu0 %v707
    %824 = vmatprep.subr.mxu0 0.0
    %825 = vmatpush1.msra.mxu0 %v708
    %826 = vmatprep.subr.mxu0 0.0
    %827 = vmatpush1.msra.mxu0 %v709
    %828 = vmatprep.subr.mxu0 0.0
    %829 = vmatpush1.msra.mxu0 %v710
    %830 = vmatprep.subr.mxu0 0.0
    %831 = vmatpush1.msra.mxu0 %v711
    %832 = vmatprep.subr.mxu0 0.0
    %833 = vmatpush1.msra.mxu0 %v712
    %834 = vmatprep.subr.mxu0 0.0
    %835 = vmatpush1.msra.mxu0 %v713
    %836 = vmatprep.subr.mxu0 0.0
    %837 = vmatpush1.msra.mxu0 0.0
    %838 = vmatprep.subr.mxu0 0.0
    %839 = vmatpush1.msra.mxu0 0.0
    %840 = vmatprep.subr.mxu0 0.0
    %841 = vmatpush1.msra.mxu0 0.0
    %842 = vmatprep.subr.mxu0 0.0
    %843 = vmatpush1.msra.mxu0 0.0
    %844 = vmatprep.subr.mxu0 0.0
    %845 = vmatpush1.msra.mxu0 0.0
    %846 = vmatprep.subr.mxu0 0.0
    %847 = vmatpush1.msra.mxu0 0.0
    %848 = vmatprep.subr.mxu0 0.0
    %849 = vmatpush1.msra.mxu0 0.0
    %850 = vmatprep.subr.mxu0 0.0
    %851 = vmatpush1.msra.mxu0 0.0
    %852 = vmatprep.subr.mxu0 0.0
    %853 = vmatpush1.msra.mxu0 0.0
    %854 = vmatprep.subr.mxu0 0.0
    %855 = vmatpush1.msra.mxu0 0.0
    %856 = vmatprep.subr.mxu0 0.0
    %857 = vmatpush1.msra.mxu0 0.0
    %858 = vmatprep.subr.mxu0 0.0
    %859 = vmatpush1.msra.mxu0 0.0
    %860 = vmatprep.subr.mxu0 0.0
    %861 = vmatpush1.msra.mxu0 0.0
    %862 = vmatprep.subr.mxu0 0.0
    %863 = vmatpush1.msra.mxu0 0.0
    %864 = vmatprep.subr.mxu0 0.0
    %865 = vmatpush1.msra.mxu0 0.0
    %866 = vmatprep.subr.mxu0 0.0
    %867 = vmatpush1.msra.mxu0 0.0
    %868 = vmatprep.mubr.f32.mxu0 0.0
    %869 = vmatmul.mubr.f32.gmra.mrb[0].mxu0 %v794
    %v870 = vpop.f32.mrb[0].mxu0
    %v871 = vadd.f32 0.0, %v870
    %v872 = vpop.f32.mrb[0].mxu0
    %873 = vmatprep.mubr.f32.mxu0 0.0
    %874 = vmatmul.mubr.f32.gmra.mrb[0].mxu0 %v801
    %v875 = vpop.f32.mrb[0].mxu0
    %v876 = vadd.f32 0.0, %v875
    %v877 = vpop.f32.mrb[0].mxu0
    %878 = vdwg.mxu0
    %879 = vmatprep.subr.mxu0 0.0
    %880 = vmatpush1.msra.mxu0 %v681
    %881 = vmatprep.subr.mxu0 0.0
    %882 = vmatpush1.msra.mxu0 %v682
    %883 = vmatprep.subr.mxu0 0.0
    %884 = vmatpush1.msra.mxu0 %v683
    %885 = vmatprep.subr.mxu0 0.0
    %886 = vmatpush1.msra.mxu0 %v684
    %887 = vmatprep.subr.mxu0 0.0
    %888 = vmatpush1.msra.mxu0 %v685
    %889 = vmatprep.subr.mxu0 0.0
    %890 = vmatpush1.msra.mxu0 %v686
    %891 = vmatprep.subr.mxu0 0.0
    %892 = vmatpush1.msra.mxu0 %v687
    %893 = vmatprep.subr.mxu0 0.0
    %894 = vmatpush1.msra.mxu0 %v688
    %895 = vmatprep.subr.mxu0 0.0
    %896 = vmatpush1.msra.mxu0 %v689
    %897 = vmatprep.subr.mxu0 0.0
    %898 = vmatpush1.msra.mxu0 %v690
    %899 = vmatprep.subr.mxu0 0.0
    %900 = vmatpush1.msra.mxu0 %v691
    %901 = vmatprep.subr.mxu0 0.0
    %902 = vmatpush1.msra.mxu0 %v692
    %903 = vmatprep.subr.mxu0 0.0
    %904 = vmatpush1.msra.mxu0 %v693
    %905 = vmatprep.subr.mxu0 0.0
    %906 = vmatpush1.msra.mxu0 %v694
    %907 = vmatprep.subr.mxu0 0.0
    %908 = vmatpush1.msra.mxu0 %v695
    %909 = vmatprep.subr.mxu0 0.0
    %910 = vmatpush1.msra.mxu0 %v696
    %911 = vmatprep.subr.mxu0 0.0
    %912 = vmatpush1.msra.mxu0 0.0
    %913 = vmatprep.subr.mxu0 0.0
    %914 = vmatpush1.msra.mxu0 0.0
    %915 = vmatprep.subr.mxu0 0.0
    %916 = vmatpush1.msra.mxu0 0.0
    %917 = vmatprep.subr.mxu0 0.0
    %918 = vmatpush1.msra.mxu0 0.0
    %919 = vmatprep.subr.mxu0 0.0
    %920 = vmatpush1.msra.mxu0 0.0
    %921 = vmatprep.subr.mxu0 0.0
    %922 = vmatpush1.msra.mxu0 0.0
    %923 = vmatprep.subr.mxu0 0.0
    %924 = vmatpush1.msra.mxu0 0.0
    %925 = vmatprep.subr.mxu0 0.0
    %926 = vmatpush1.msra.mxu0 0.0
    %927 = vmatprep.subr.mxu0 0.0
    %928 = vmatpush1.msra.mxu0 0.0
    %929 = vmatprep.subr.mxu0 0.0
    %930 = vmatpush1.msra.mxu0 0.0
    %931 = vmatprep.subr.mxu0 0.0
    %932 = vmatpush1.msra.mxu0 0.0
    %933 = vmatprep.subr.mxu0 0.0
    %934 = vmatpush1.msra.mxu0 0.0
    %935 = vmatprep.subr.mxu0 0.0
    %936 = vmatpush1.msra.mxu0 0.0
    %937 = vmatprep.subr.mxu0 0.0
    %938 = vmatpush1.msra.mxu0 0.0
    %939 = vmatprep.subr.mxu0 0.0
    %940 = vmatpush1.msra.mxu0 0.0
    %941 = vmatprep.subr.mxu0 0.0
    %942 = vmatpush1.msra.mxu0 0.0
    %943 = vmatprep.mubr.f32.mxu0 0.0
    %944 = vmatmul.mubr.f32.gmra.mrb[0].mxu0 %v767
    %v945 = vpop.f32.mrb[0].mxu0
    %v946 = vadd.f32 %v871, %v945
    %v947 = vpop.f32.mrb[0].mxu0
    %948 = vmatprep.mubr.f32.mxu0 0.0
    %949 = vmatmul.mubr.f32.gmra.mrb[0].mxu0 %v768
    %v950 = vpop.f32.mrb[0].mxu0
    %v951 = vadd.f32 %v876, %v950
    %v952 = vpop.f32.mrb[0].mxu0
    %953 = vdwg.mxu0
    %954 = vmatprep.subr.mxu0 0.0
    %955 = vmatpush1.msra.mxu0 %v715
    %956 = vmatprep.subr.mxu0 0.0
    %957 = vmatpush1.msra.mxu0 %v716
    %958 = vmatprep.subr.mxu0 0.0
    %959 = vmatpush1.msra.mxu0 %v717
    %960 = vmatprep.subr.mxu0 0.0
    %961 = vmatpush1.msra.mxu0 %v718
    %962 = vmatprep.subr.mxu0 0.0
    %963 = vmatpush1.msra.mxu0 %v719
    %964 = vmatprep.subr.mxu0 0.0
    %965 = vmatpush1.msra.mxu0 %v720
    %966 = vmatprep.subr.mxu0 0.0
    %967 = vmatpush1.msra.mxu0 %v721
    %968 = vmatprep.subr.mxu0 0.0
    %969 = vmatpush1.msra.mxu0 %v722
    %970 = vmatprep.subr.mxu0 0.0
    %971 = vmatpush1.msra.mxu0 %v723
    %972 = vmatprep.subr.mxu0 0.0
    %973 = vmatpush1.msra.mxu0 %v724
    %974 = vmatprep.subr.mxu0 0.0
    %975 = vmatpush1.msra.mxu0 %v725
    %976 = vmatprep.subr.mxu0 0.0
    %977 = vmatpush1.msra.mxu0 %v726
    %978 = vmatprep.subr.mxu0 0.0
    %979 = vmatpush1.msra.mxu0 %v727
    %980 = vmatprep.subr.mxu0 0.0
    %981 = vmatpush1.msra.mxu0 %v728
    %982 = vmatprep.subr.mxu0 0.0
    %983 = vmatpush1.msra.mxu0 %v729
    %984 = vmatprep.subr.mxu0 0.0
    %985 = vmatpush1.msra.mxu0 %v730
    %986 = vmatprep.subr.mxu0 0.0
    %987 = vmatpush1.msra.mxu0 0.0
    %988 = vmatprep.subr.mxu0 0.0
    %989 = vmatpush1.msra.mxu0 0.0
    %990 = vmatprep.subr.mxu0 0.0
    %991 = vmatpush1.msra.mxu0 0.0
    %992 = vmatprep.subr.mxu0 0.0
    %993 = vmatpush1.msra.mxu0 0.0
    %994 = vmatprep.subr.mxu0 0.0
    %995 = vmatpush1.msra.mxu0 0.0
    %996 = vmatprep.subr.mxu0 0.0
    %997 = vmatpush1.msra.mxu0 0.0
    %998 = vmatprep.subr.mxu0 0.0
    %999 = vmatpush1.msra.mxu0 0.0
    %1000 = vmatprep.subr.mxu0 0.0
    %1001 = vmatpush1.msra.mxu0 0.0
    %1002 = vmatprep.subr.mxu0 0.0
    %1003 = vmatpush1.msra.mxu0 0.0
    %1004 = vmatprep.subr.mxu0 0.0
    %1005 = vmatpush1.msra.mxu0 0.0
    %1006 = vmatprep.subr.mxu0 0.0
    %1007 = vmatpush1.msra.mxu0 0.0
    %1008 = vmatprep.subr.mxu0 0.0
    %1009 = vmatpush1.msra.mxu0 0.0
    %1010 = vmatprep.subr.mxu0 0.0
    %1011 = vmatpush1.msra.mxu0 0.0
    %1012 = vmatprep.subr.mxu0 0.0
    %1013 = vmatpush1.msra.mxu0 0.0
    %1014 = vmatprep.subr.mxu0 0.0
    %1015 = vmatpush1.msra.mxu0 0.0
    %1016 = vmatprep.subr.mxu0 0.0
    %1017 = vmatpush1.msra.mxu0 0.0
    %1018 = vmatprep.mubr.f32.mxu0 0.0
    %1019 = vmatmul.mubr.f32.gmra.mrb[0].mxu0 %v786
    %v1020 = vpop.f32.mrb[0].mxu0
    %v1021 = vadd.f32 0.0, %v1020
    %v1022 = vpop.f32.mrb[0].mxu0
    %1023 = vmatprep.mubr.f32.mxu0 0.0
    %1024 = vmatmul.mubr.f32.gmra.mrb[0].mxu0 %v787
    %v1025 = vpop.f32.mrb[0].mxu0
    %v1026 = vadd.f32 0.0, %v1025
    %v1027 = vpop.f32.mrb[0].mxu0
    %1028 = vdwg.mxu0
    %v1029 = vadd.f32 %v946, %v1021
    %v1030 = vadd.f32 %v951, %v1026
    %v1031 = vlaneseq
    %v1032 = vshrl.u32 %v1031, 7
    %v1033 = vsub.s32 0, %v1032
    %v1034 = vrot.slane %v732, %v1033
    %v1035 = vadd.f32 %v1029, %v1034
    %v1036 = vadd.f32 %v1030, %v1034
    %v1037 = vrot.slane %v1035, 4
    %v1038 = vadd.f32 %v1035, %v1037
    %v1039 = vrot.slane %v1038, 2
    %v1040 = vadd.f32 %v1038, %v1039
    %v1041 = vrot.slane %v1040, 1
    %v1042 = vadd.f32 %v1040, %v1041
    %v1043 = vrot.slane %v1036, 4
    %v1044 = vadd.f32 %v1036, %v1043
    %v1045 = vrot.slane %v1044, 2
    %v1046 = vadd.f32 %v1044, %v1045
    %v1047 = vrot.slane %v1046, 1
    %v1048 = vadd.f32 %v1046, %v1047
    %v1049 = vrcp.pop 8.0
    %v1050 = vmul.f32 %v1042, %v1049
    %v1051 = vmul.f32 %v1048, %v1049
    %v1052 = vsub.f32 %v1035, %v1050
    %v1053 = vsub.f32 %v1036, %v1051
    %v1054 = vmul.f32 %v1052, %v1052
    %v1055 = vmul.f32 %v1053, %v1053
    %v1056 = vrot.slane %v1054, 4
    %v1057 = vadd.f32 %v1054, %v1056
    %v1058 = vrot.slane %v1057, 2
    %v1059 = vadd.f32 %v1057, %v1058
    %v1060 = vrot.slane %v1059, 1
    %v1061 = vadd.f32 %v1059, %v1060
    %v1062 = vrot.slane %v1055, 4
    %v1063 = vadd.f32 %v1055, %v1062
    %v1064 = vrot.slane %v1063, 2
    %v1065 = vadd.f32 %v1063, %v1064
    %v1066 = vrot.slane %v1065, 1
    %v1067 = vadd.f32 %v1065, %v1066
    %v1068 = vmul.f32 %v1061, %v1049
    %v1069 = vmul.f32 %v1067, %v1049
    %v1070 = vadd.f32 %v1068, 1e-05
    %v1071 = vadd.f32 %v1069, 1e-05
    %v1072 = vrsqrt.pop %v1070
    %v1073 = vrsqrt.pop %v1071
    %v1074 = vmul.f32 %v1052, %v1072
    %v1075 = vmul.f32 %v1053, %v1073
    %v1076 = vlaneseq
    %v1077 = vshrl.u32 %v1076, 7
    %v1078 = vsub.s32 1, %v1077
    %v1079 = vrot.slane %v732, %v1078
    %v1080 = vmul.f32 %v1074, %v1079
    %v1081 = vmul.f32 %v1075, %v1079
    %v1082 = vlaneseq
    %v1083 = vshrl.u32 %v1082, 7
    %v1084 = vsub.s32 2, %v1083
    %v1085 = vrot.slane %v732, %v1084
    %v1086 = vadd.f32 %v1080, %v1085
    %v1087 = vadd.f32 %v1081, %v1085
    %v1088 = vmax.f32 %v1086, 0.0
    %v1089 = vmax.f32 %v1087, 0.0
    %v1092 = vcombine.high %v1088, %v1088
    %v1094 = vunpack.c.l.s4 1983009808
    %v1095 = vunpack.c.0.s8 %v1094
    %v1096 = vlaneseq
    %v1097 = vshrl.u32 %v1096, 7
    %v1098 = vsub.s32 %v1095, %v1097
    %v1099 = vrot.slane %v1088, %v1098
    %v1101 = vunpack.c.l.s4 1983009808
    %v1102 = vunpack.c.0.s8 %v1101
    %v1103 = vlaneseq
    %v1104 = vshrl.u32 %v1103, 7
    %v1105 = vsub.s32 %v1102, %v1104
    %v1106 = vrot.slane %v1092, %v1105
    %v1107 = vcombine.high %v1099, %v1099
    %v1108 = vcombine.high %v1106, %v1106
    %v1109 = vcombine.high %v1089, %v1089
    %v1111 = vunpack.c.l.s4 1983009808
    %v1112 = vunpack.c.0.s8 %v1111
    %v1113 = vlaneseq
    %v1114 = vshrl.u32 %v1113, 7
    %v1115 = vsub.s32 %v1112, %v1114
    %v1116 = vrot.slane %v1089, %v1115
    %v1118 = vunpack.c.l.s4 1983009808
    %v1119 = vunpack.c.0.s8 %v1118
    %v1120 = vlaneseq
    %v1121 = vshrl.u32 %v1120, 7
    %v1122 = vsub.s32 %v1119, %v1121
    %v1123 = vrot.slane %v1109, %v1122
    %v1124 = vcombine.high %v1116, %v1116
    %v1125 = vcombine.high %v1123, %v1123
    %v1134 = vsel %vm551, %v1099, 0.0
    %v1135 = vrot.slane %v1134, 4
    %v1136 = vadd.f32 %v1134, %v1135
    %v1137 = vrot.slane %v1136, 2
    %v1138 = vadd.f32 %v1136, %v1137
    %v1139 = vrot.slane %v1138, 1
    %v1140 = vadd.f32 %v1138, %v1139
    %v1141 = vsel %vm551, %v1107, 0.0
    %v1142 = vrot.slane %v1141, 4
    %v1143 = vadd.f32 %v1141, %v1142
    %v1144 = vrot.slane %v1143, 2
    %v1145 = vadd.f32 %v1143, %v1144
    %v1146 = vrot.slane %v1145, 1
    %v1147 = vadd.f32 %v1145, %v1146
    %v1148 = vsel %vm551, %v1106, 0.0
    %v1149 = vrot.slane %v1148, 4
    %v1150 = vadd.f32 %v1148, %v1149
    %v1151 = vrot.slane %v1150, 2
    %v1152 = vadd.f32 %v1150, %v1151
    %v1153 = vrot.slane %v1152, 1
    %v1154 = vadd.f32 %v1152, %v1153
    %v1155 = vsel %vm551, %v1108, 0.0
    %v1156 = vrot.slane %v1155, 4
    %v1157 = vadd.f32 %v1155, %v1156
    %v1158 = vrot.slane %v1157, 2
    %v1159 = vadd.f32 %v1157, %v1158
    %v1160 = vrot.slane %v1159, 1
    %v1161 = vadd.f32 %v1159, %v1160
    %v1162 = vsel %vm551, %v1116, 0.0
    %v1163 = vrot.slane %v1162, 4
    %v1164 = vadd.f32 %v1162, %v1163
    %v1165 = vrot.slane %v1164, 2
    %v1166 = vadd.f32 %v1164, %v1165
    %v1167 = vrot.slane %v1166, 1
    %v1168 = vadd.f32 %v1166, %v1167
    %v1169 = vsel %vm551, %v1124, 0.0
    %v1170 = vrot.slane %v1169, 4
    %v1171 = vadd.f32 %v1169, %v1170
    %v1172 = vrot.slane %v1171, 2
    %v1173 = vadd.f32 %v1171, %v1172
    %v1174 = vrot.slane %v1173, 1
    %v1175 = vadd.f32 %v1173, %v1174
    %v1176 = vsel %vm551, %v1123, 0.0
    %v1177 = vrot.slane %v1176, 4
    %v1178 = vadd.f32 %v1176, %v1177
    %v1179 = vrot.slane %v1178, 2
    %v1180 = vadd.f32 %v1178, %v1179
    %v1181 = vrot.slane %v1180, 1
    %v1182 = vadd.f32 %v1180, %v1181
    %v1183 = vsel %vm551, %v1125, 0.0
    %v1184 = vrot.slane %v1183, 4
    %v1185 = vadd.f32 %v1183, %v1184
    %v1186 = vrot.slane %v1185, 2
    %v1187 = vadd.f32 %v1185, %v1186
    %v1188 = vrot.slane %v1187, 1
    %v1189 = vadd.f32 %v1187, %v1188
    %v1190 = vmul.f32 %v1140, %v664
    %v1191 = vmul.f32 %v1147, %v664
    %v1192 = vmul.f32 %v1154, %v664
    %v1193 = vmul.f32 %v1161, %v664
    %v1194 = vmul.f32 %v1168, %v664
    %v1195 = vmul.f32 %v1175, %v664
    %v1196 = vmul.f32 %v1182, %v664
    %v1197 = vmul.f32 %v1189, %v664
    %s1198 = scalar_lea.vmem [#allocation2], 384
    %v1199 = vld [vmem:[%s1198] sm:$0xff]
    %v1200 = vld [vmem:[%s1198 + $0x8] sm:$0xff]
    %v1201 = vld [vmem:[%s1198 + $0x10] sm:$0xff]
    %v1202 = vld [vmem:[%s1198 + $0x18] sm:$0xff]
    %v1203 = vld [vmem:[%s1198 + $0x20] sm:$0xff]
    %v1204 = vld [vmem:[%s1198 + $0x28] sm:$0xff]
    %v1205 = vld [vmem:[%s1198 + $0x30] sm:$0xff]
    %v1206 = vld [vmem:[%s1198 + $0x38] sm:$0xff]
    %v1207 = vld [vmem:[%s1198 + $0x40] sm:$0xff]
    %v1208 = vld [vmem:[%s1198 + $0x48] sm:$0xff]
    %v1209 = vld [vmem:[%s1198 + $0x50] sm:$0xff]
    %v1210 = vld [vmem:[%s1198 + $0x58] sm:$0xff]
    %v1211 = vld [vmem:[%s1198 + $0x60] sm:$0xff]
    %v1212 = vld [vmem:[%s1198 + $0x68] sm:$0xff]
    %v1213 = vld [vmem:[%s1198 + $0x70] sm:$0xff]
    %v1214 = vld [vmem:[%s1198 + $0x78] sm:$0xff]
    %s1215 = scalar_lea.vmem [#allocation2], 512
    %v1216 = vld [vmem:[%s1215] sm:$0xff]
    %v1217 = vld [vmem:[%s1215 + $0x8] sm:$0xff]
    %v1218 = vld [vmem:[%s1215 + $0x10] sm:$0xff]
    %v1219 = vld [vmem:[%s1215 + $0x18] sm:$0xff]
    %v1220 = vld [vmem:[%s1215 + $0x20] sm:$0xff]
    %v1221 = vld [vmem:[%s1215 + $0x28] sm:$0xff]
    %v1222 = vld [vmem:[%s1215 + $0x30] sm:$0xff]
    %v1223 = vld [vmem:[%s1215 + $0x38] sm:$0xff]
    %v1224 = vld [vmem:[%s1215 + $0x40] sm:$0xff]
    %v1225 = vld [vmem:[%s1215 + $0x48] sm:$0xff]
    %v1226 = vld [vmem:[%s1215 + $0x50] sm:$0xff]
    %v1227 = vld [vmem:[%s1215 + $0x58] sm:$0xff]
    %v1228 = vld [vmem:[%s1215 + $0x60] sm:$0xff]
    %v1229 = vld [vmem:[%s1215 + $0x68] sm:$0xff]
    %v1230 = vld [vmem:[%s1215 + $0x70] sm:$0xff]
    %v1231 = vld [vmem:[%s1215 + $0x78] sm:$0xff]
    %s1232 = scalar_lea.vmem [#allocation2], 640
    %v1233 = vld [vmem:[%s1232] sm:$0xff]
    %v1234 = vld [vmem:[%s1232 + $0x8] sm:$0xff]
    %v1235 = vld [vmem:[%s1232 + $0x10] sm:$0xff]
    %v1236 = vld [vmem:[%s1232 + $0x18] sm:$0xff]
    %v1237 = vld [vmem:[%s1232 + $0x20] sm:$0xff]
    %v1238 = vld [vmem:[%s1232 + $0x28] sm:$0xff]
    %v1239 = vld [vmem:[%s1232 + $0x30] sm:$0xff]
    %v1240 = vld [vmem:[%s1232 + $0x38] sm:$0xff]
    %v1241 = vld [vmem:[%s1232 + $0x40] sm:$0xff]
    %v1242 = vld [vmem:[%s1232 + $0x48] sm:$0xff]
    %v1243 = vld [vmem:[%s1232 + $0x50] sm:$0xff]
    %v1244 = vld [vmem:[%s1232 + $0x58] sm:$0xff]
    %v1245 = vld [vmem:[%s1232 + $0x60] sm:$0xff]
    %v1246 = vld [vmem:[%s1232 + $0x68] sm:$0xff]
    %v1247 = vld [vmem:[%s1232 + $0x70] sm:$0xff]
    %v1248 = vld [vmem:[%s1232 + $0x78] sm:$0xff]
    %s1249 = scalar_lea.vmem %s3, 8
    %v1250 = vld [vmem:[%s1249] sm:$0x7]
    %v1257 = vsel %vm747, %v1191, %v1190
    %v1258 = vsel %vm749, %v1192, %v1257
    %v1259 = vsel %vm747, %v1195, %v1194
    %v1260 = vsel %vm749, %v1196, %v1259
    %v1263 = vsel %vm66, 0.0, %v1258
    %v1264 = vsel %vm66, 0.0, %v1260
    %v1267 = vsel %vm771, %v1192, %v1191
    %v1268 = vsel %vm747, %v1193, %v1267
    %v1269 = vsel %vm771, %v1196, %v1195
    %v1270 = vsel %vm747, %v1197, %v1269
    %vm1273 = vcmask 1042432
    %v1274 = vsel %vm1273, %v1268, 0.0
    %v1275 = vsel %vm1273, %v1270, 0.0
    %v1276 = vsel %vm771, %v1191, %v1190
    %v1277 = vsel %vm747, %v1192, %v1276
    %v1278 = vsel %vm749, %v1193, %v1277
    %v1279 = vsel %vm751, %v1194, %v1278
    %v1280 = vsel %vm753, %v1195, %v1279
    %v1281 = vsel %vm755, %v1196, %v1280
    %v1282 = vsel %vm757, %v1197, %v1281
    %1284 = vmatprep.subr.mxu0 0.0
    %1285 = vmatpush1.msra.mxu0 %v1216
    %1286 = vmatprep.subr.mxu0 0.0
    %1287 = vmatpush1.msra.mxu0 %v1217
    %1288 = vmatprep.subr.mxu0 0.0
    %1289 = vmatpush1.msra.mxu0 %v1218
    %1290 = vmatprep.subr.mxu0 0.0
    %1291 = vmatpush1.msra.mxu0 %v1219
    %1292 = vmatprep.subr.mxu0 0.0
    %1293 = vmatpush1.msra.mxu0 %v1220
    %1294 = vmatprep.subr.mxu0 0.0
    %1295 = vmatpush1.msra.mxu0 %v1221
    %1296 = vmatprep.subr.mxu0 0.0
    %1297 = vmatpush1.msra.mxu0 %v1222
    %1298 = vmatprep.subr.mxu0 0.0
    %1299 = vmatpush1.msra.mxu0 %v1223
    %1300 = vmatprep.subr.mxu0 0.0
    %1301 = vmatpush1.msra.mxu0 %v1224
    %1302 = vmatprep.subr.mxu0 0.0
    %1303 = vmatpush1.msra.mxu0 %v1225
    %1304 = vmatprep.subr.mxu0 0.0
    %1305 = vmatpush1.msra.mxu0 %v1226
    %1306 = vmatprep.subr.mxu0 0.0
    %1307 = vmatpush1.msra.mxu0 %v1227
    %1308 = vmatprep.subr.mxu0 0.0
    %1309 = vmatpush1.msra.mxu0 %v1228
    %1310 = vmatprep.subr.mxu0 0.0
    %1311 = vmatpush1.msra.mxu0 %v1229
    %1312 = vmatprep.subr.mxu0 0.0
    %1313 = vmatpush1.msra.mxu0 %v1230
    %1314 = vmatprep.subr.mxu0 0.0
    %1315 = vmatpush1.msra.mxu0 %v1231
    %1316 = vmatprep.subr.mxu0 0.0
    %1317 = vmatpush1.msra.mxu0 0.0
    %1318 = vmatprep.subr.mxu0 0.0
    %1319 = vmatpush1.msra.mxu0 0.0
    %1320 = vmatprep.subr.mxu0 0.0
    %1321 = vmatpush1.msra.mxu0 0.0
    %1322 = vmatprep.subr.mxu0 0.0
    %1323 = vmatpush1.msra.mxu0 0.0
    %1324 = vmatprep.subr.mxu0 0.0
    %1325 = vmatpush1.msra.mxu0 0.0
    %1326 = vmatprep.subr.mxu0 0.0
    %1327 = vmatpush1.msra.mxu0 0.0
    %1328 = vmatprep.subr.mxu0 0.0
    %1329 = vmatpush1.msra.mxu0 0.0
    %1330 = vmatprep.subr.mxu0 0.0
    %1331 = vmatpush1.msra.mxu0 0.0
    %1332 = vmatprep.subr.mxu0 0.0
    %1333 = vmatpush1.msra.mxu0 0.0
    %1334 = vmatprep.subr.mxu0 0.0
    %1335 = vmatpush1.msra.mxu0 0.0
    %1336 = vmatprep.subr.mxu0 0.0
    %1337 = vmatpush1.msra.mxu0 0.0
    %1338 = vmatprep.subr.mxu0 0.0
    %1339 = vmatpush1.msra.mxu0 0.0
    %1340 = vmatprep.subr.mxu0 0.0
    %1341 = vmatpush1.msra.mxu0 0.0
    %1342 = vmatprep.subr.mxu0 0.0
    %1343 = vmatpush1.msra.mxu0 0.0
    %1344 = vmatprep.subr.mxu0 0.0
    %1345 = vmatpush1.msra.mxu0 0.0
    %1346 = vmatprep.subr.mxu0 0.0
    %1347 = vmatpush1.msra.mxu0 0.0
    %1348 = vmatprep.mubr.f32.mxu0 0.0
    %1349 = vmatmul.mubr.f32.gmra.mrb[0].mxu0 %v1282
    %v1350 = vpop.f32.mrb[0].mxu0
    %v1351 = vadd.f32 0.0, %v1350
    %v1352 = vpop.f32.mrb[0].mxu0
    %1353 = vdwg.mxu0
    %v1356 = vcombine.low %v1263, %v1264
    %1358 = vmatprep.subr.mxu0 0.0
    %1359 = vmatpush1.msra.mxu0 %v1199
    %1360 = vmatprep.subr.mxu0 0.0
    %1361 = vmatpush1.msra.mxu0 %v1200
    %1362 = vmatprep.subr.mxu0 0.0
    %1363 = vmatpush1.msra.mxu0 %v1201
    %1364 = vmatprep.subr.mxu0 0.0
    %1365 = vmatpush1.msra.mxu0 %v1202
    %1366 = vmatprep.subr.mxu0 0.0
    %1367 = vmatpush1.msra.mxu0 %v1203
    %1368 = vmatprep.subr.mxu0 0.0
    %1369 = vmatpush1.msra.mxu0 %v1204
    %1370 = vmatprep.subr.mxu0 0.0
    %1371 = vmatpush1.msra.mxu0 %v1205
    %1372 = vmatprep.subr.mxu0 0.0
    %1373 = vmatpush1.msra.mxu0 %v1206
    %1374 = vmatprep.subr.mxu0 0.0
    %1375 = vmatpush1.msra.mxu0 %v1207
    %1376 = vmatprep.subr.mxu0 0.0
    %1377 = vmatpush1.msra.mxu0 %v1208
    %1378 = vmatprep.subr.mxu0 0.0
    %1379 = vmatpush1.msra.mxu0 %v1209
    %1380 = vmatprep.subr.mxu0 0.0
    %1381 = vmatpush1.msra.mxu0 %v1210
    %1382 = vmatprep.subr.mxu0 0.0
    %1383 = vmatpush1.msra.mxu0 %v1211
    %1384 = vmatprep.subr.mxu0 0.0
    %1385 = vmatpush1.msra.mxu0 %v1212
    %1386 = vmatprep.subr.mxu0 0.0
    %1387 = vmatpush1.msra.mxu0 %v1213
    %1388 = vmatprep.subr.mxu0 0.0
    %1389 = vmatpush1.msra.mxu0 %v1214
    %1390 = vmatprep.subr.mxu0 0.0
    %1391 = vmatpush1.msra.mxu0 0.0
    %1392 = vmatprep.subr.mxu0 0.0
    %1393 = vmatpush1.msra.mxu0 0.0
    %1394 = vmatprep.subr.mxu0 0.0
    %1395 = vmatpush1.msra.mxu0 0.0
    %1396 = vmatprep.subr.mxu0 0.0
    %1397 = vmatpush1.msra.mxu0 0.0
    %1398 = vmatprep.subr.mxu0 0.0
    %1399 = vmatpush1.msra.mxu0 0.0
    %1400 = vmatprep.subr.mxu0 0.0
    %1401 = vmatpush1.msra.mxu0 0.0
    %1402 = vmatprep.subr.mxu0 0.0
    %1403 = vmatpush1.msra.mxu0 0.0
    %1404 = vmatprep.subr.mxu0 0.0
    %1405 = vmatpush1.msra.mxu0 0.0
    %1406 = vmatprep.subr.mxu0 0.0
    %1407 = vmatpush1.msra.mxu0 0.0
    %1408 = vmatprep.subr.mxu0 0.0
    %1409 = vmatpush1.msra.mxu0 0.0
    %1410 = vmatprep.subr.mxu0 0.0
    %1411 = vmatpush1.msra.mxu0 0.0
    %1412 = vmatprep.subr.mxu0 0.0
    %1413 = vmatpush1.msra.mxu0 0.0
    %1414 = vmatprep.subr.mxu0 0.0
    %1415 = vmatpush1.msra.mxu0 0.0
    %1416 = vmatprep.subr.mxu0 0.0
    %1417 = vmatpush1.msra.mxu0 0.0
    %1418 = vmatprep.subr.mxu0 0.0
    %1419 = vmatpush1.msra.mxu0 0.0
    %1420 = vmatprep.subr.mxu0 0.0
    %1421 = vmatpush1.msra.mxu0 0.0
    %1422 = vmatprep.mubr.f32.mxu0 0.0
    %1423 = vmatmul.mubr.f32.gmra.mrb[0].mxu0 %v1356
    %v1424 = vpop.f32.mrb[0].mxu0
    %v1425 = vadd.f32 %v1351, %v1424
    %v1426 = vpop.f32.mrb[0].mxu0
    %1427 = vdwg.mxu0
    %v1430 = vcombine.low %v1274, %v1275
    %1432 = vmatprep.subr.mxu0 0.0
    %1433 = vmatpush1.msra.mxu0 %v1233
    %1434 = vmatprep.subr.mxu0 0.0
    %1435 = vmatpush1.msra.mxu0 %v1234
    %1436 = vmatprep.subr.mxu0 0.0
    %1437 = vmatpush1.msra.mxu0 %v1235
    %1438 = vmatprep.subr.mxu0 0.0
    %1439 = vmatpush1.msra.mxu0 %v1236
    %1440 = vmatprep.subr.mxu0 0.0
    %1441 = vmatpush1.msra.mxu0 %v1237
    %1442 = vmatprep.subr.mxu0 0.0
    %1443 = vmatpush1.msra.mxu0 %v1238
    %1444 = vmatprep.subr.mxu0 0.0
    %1445 = vmatpush1.msra.mxu0 %v1239
    %1446 = vmatprep.subr.mxu0 0.0
    %1447 = vmatpush1.msra.mxu0 %v1240
    %1448 = vmatprep.subr.mxu0 0.0
    %1449 = vmatpush1.msra.mxu0 %v1241
    %1450 = vmatprep.subr.mxu0 0.0
    %1451 = vmatpush1.msra.mxu0 %v1242
    %1452 = vmatprep.subr.mxu0 0.0
    %1453 = vmatpush1.msra.mxu0 %v1243
    %1454 = vmatprep.subr.mxu0 0.0
    %1455 = vmatpush1.msra.mxu0 %v1244
    %1456 = vmatprep.subr.mxu0 0.0
    %1457 = vmatpush1.msra.mxu0 %v1245
    %1458 = vmatprep.subr.mxu0 0.0
    %1459 = vmatpush1.msra.mxu0 %v1246
    %1460 = vmatprep.subr.mxu0 0.0
    %1461 = vmatpush1.msra.mxu0 %v1247
    %1462 = vmatprep.subr.mxu0 0.0
    %1463 = vmatpush1.msra.mxu0 %v1248
    %1464 = vmatprep.subr.mxu0 0.0
    %1465 = vmatpush1.msra.mxu0 0.0
    %1466 = vmatprep.subr.mxu0 0.0
    %1467 = vmatpush1.msra.mxu0 0.0
    %1468 = vmatprep.subr.mxu0 0.0
    %1469 = vmatpush1.msra.mxu0 0.0
    %1470 = vmatprep.subr.mxu0 0.0
    %1471 = vmatpush1.msra.mxu0 0.0
    %1472 = vmatprep.subr.mxu0 0.0
    %1473 = vmatpush1.msra.mxu0 0.0
    %1474 = vmatprep.subr.mxu0 0.0
    %1475 = vmatpush1.msra.mxu0 0.0
    %1476 = vmatprep.subr.mxu0 0.0
    %1477 = vmatpush1.msra.mxu0 0.0
    %1478 = vmatprep.subr.mxu0 0.0
    %1479 = vmatpush1.msra.mxu0 0.0
    %1480 = vmatprep.subr.mxu0 0.0
    %1481 = vmatpush1.msra.mxu0 0.0
    %1482 = vmatprep.subr.mxu0 0.0
    %1483 = vmatpush1.msra.mxu0 0.0
    %1484 = vmatprep.subr.mxu0 0.0
    %1485 = vmatpush1.msra.mxu0 0.0
    %1486 = vmatprep.subr.mxu0 0.0
    %1487 = vmatpush1.msra.mxu0 0.0
    %1488 = vmatprep.subr.mxu0 0.0
    %1489 = vmatpush1.msra.mxu0 0.0
    %1490 = vmatprep.subr.mxu0 0.0
    %1491 = vmatpush1.msra.mxu0 0.0
    %1492 = vmatprep.subr.mxu0 0.0
    %1493 = vmatpush1.msra.mxu0 0.0
    %1494 = vmatprep.subr.mxu0 0.0
    %1495 = vmatpush1.msra.mxu0 0.0
    %1496 = vmatprep.mubr.f32.mxu0 0.0
    %1497 = vmatmul.mubr.f32.gmra.mrb[0].mxu0 %v1430
    %v1498 = vpop.f32.mrb[0].mxu0
    %v1499 = vadd.f32 0.0, %v1498
    %v1500 = vpop.f32.mrb[0].mxu0
    %1501 = vdwg.mxu0
    %v1502 = vadd.f32 %v1425, %v1499
    %v1504 = vcombine.high %v1502, %v1502
    %v1506 = vlaneseq
    %v1507 = vshrl.u32 %v1506, 7
    %v1508 = vsub.s32 0, %v1507
    %v1509 = vrot.slane %v1250, %v1508
    %v1510 = vadd.f32 %v1502, %v1509
    %v1511 = vadd.f32 %v1504, %v1509
    %v1512 = vsel %vm97, %v1510, 0.0
    %v1513 = vrot.slane %v1512, 4
    %v1514 = vadd.f32 %v1512, %v1513
    %v1515 = vrot.slane %v1514, 2
    %v1516 = vadd.f32 %v1514, %v1515
    %v1517 = vrot.slane %v1516, 1
    %v1518 = vadd.f32 %v1516, %v1517
    %v1519 = vsel %vm97, %v1511, 0.0
    %v1520 = vrot.slane %v1519, 4
    %v1521 = vadd.f32 %v1519, %v1520
    %v1522 = vrot.slane %v1521, 2
    %v1523 = vadd.f32 %v1521, %v1522
    %v1524 = vrot.slane %v1523, 1
    %v1525 = vadd.f32 %v1523, %v1524
    %v1526 = vrcp.pop 4.0
    %v1527 = vmul.f32 %v1518, %v1526
    %v1528 = vmul.f32 %v1525, %v1526
    %v1529 = vsub.f32 %v1510, %v1527
    %v1530 = vsub.f32 %v1511, %v1528
    %v1531 = vmul.f32 %v1529, %v1529
    %v1532 = vmul.f32 %v1530, %v1530
    %v1533 = vsel %vm97, %v1531, 0.0
    %v1534 = vrot.slane %v1533, 4
    %v1535 = vadd.f32 %v1533, %v1534
    %v1536 = vrot.slane %v1535, 2
    %v1537 = vadd.f32 %v1535, %v1536
    %v1538 = vrot.slane %v1537, 1
    %v1539 = vadd.f32 %v1537, %v1538
    %v1540 = vsel %vm97, %v1532, 0.0
    %v1541 = vrot.slane %v1540, 4
    %v1542 = vadd.f32 %v1540, %v1541
    %v1543 = vrot.slane %v1542, 2
    %v1544 = vadd.f32 %v1542, %v1543
    %v1545 = vrot.slane %v1544, 1
    %v1546 = vadd.f32 %v1544, %v1545
    %v1547 = vmul.f32 %v1539, %v1526
    %v1548 = vmul.f32 %v1546, %v1526
    %v1549 = vadd.f32 %v1547, 1e-05
    %v1550 = vadd.f32 %v1548, 1e-05
    %v1551 = vrsqrt.pop %v1549
    %v1552 = vrsqrt.pop %v1550
    %v1553 = vmul.f32 %v1529, %v1551
    %v1554 = vmul.f32 %v1530, %v1552
    %v1555 = vlaneseq
    %v1556 = vshrl.u32 %v1555, 7
    %v1557 = vsub.s32 1, %v1556
    %v1558 = vrot.slane %v1250, %v1557
    %v1559 = vmul.f32 %v1553, %v1558
    %v1560 = vmul.f32 %v1554, %v1558
    %v1561 = vlaneseq
    %v1562 = vshrl.u32 %v1561, 7
    %v1563 = vsub.s32 2, %v1562
    %v1564 = vrot.slane %v1250, %v1563
    %v1565 = vadd.f32 %v1559, %v1564
    %v1566 = vadd.f32 %v1560, %v1564
    %v1567 = vmax.f32 %v1565, 0.0
    %v1568 = vmax.f32 %v1566, 0.0
    %v1572 = vunpack.c.l.s4 1983009808
    %v1573 = vunpack.c.0.s8 %v1572
    %v1574 = vlaneseq
    %v1575 = vshrl.u32 %v1574, 7
    %v1576 = vsub.s32 %v1573, %v1575
    %v1577 = vrot.slane %v1567, %v1576
    %v1578 = vcombine.high %v1577, %v1577
    %v1580 = vunpack.c.l.s4 1983009808
    %v1581 = vunpack.c.0.s8 %v1580
    %v1582 = vlaneseq
    %v1583 = vshrl.u32 %v1582, 7
    %v1584 = vsub.s32 %v1581, %v1583
    %v1585 = vrot.slane %v1568, %v1584
    %v1586 = vcombine.high %v1585, %v1585
    %v1591 = vsel %vm551, %v1577, 0.0
    %v1592 = vrot.slane %v1591, 4
    %v1593 = vadd.f32 %v1591, %v1592
    %v1594 = vrot.slane %v1593, 2
    %v1595 = vadd.f32 %v1593, %v1594
    %v1596 = vrot.slane %v1595, 1
    %v1597 = vadd.f32 %v1595, %v1596
    %v1598 = vsel %vm551, %v1578, 0.0
    %v1599 = vrot.slane %v1598, 4
    %v1600 = vadd.f32 %v1598, %v1599
    %v1601 = vrot.slane %v1600, 2
    %v1602 = vadd.f32 %v1600, %v1601
    %v1603 = vrot.slane %v1602, 1
    %v1604 = vadd.f32 %v1602, %v1603
    %v1605 = vsel %vm551, %v1585, 0.0
    %v1606 = vrot.slane %v1605, 4
    %v1607 = vadd.f32 %v1605, %v1606
    %v1608 = vrot.slane %v1607, 2
    %v1609 = vadd.f32 %v1607, %v1608
    %v1610 = vrot.slane %v1609, 1
    %v1611 = vadd.f32 %v1609, %v1610
    %v1612 = vsel %vm551, %v1586, 0.0
    %v1613 = vrot.slane %v1612, 4
    %v1614 = vadd.f32 %v1612, %v1613
    %v1615 = vrot.slane %v1614, 2
    %v1616 = vadd.f32 %v1614, %v1615
    %v1617 = vrot.slane %v1616, 1
    %v1618 = vadd.f32 %v1616, %v1617
    %v1619 = vmul.f32 %v1597, %v664
    %v1620 = vmul.f32 %v1604, %v664
    %v1621 = vmul.f32 %v1611, %v664
    %v1622 = vmul.f32 %v1618, %v664
    %v1627 = vsel %vm771, %v1620, %v1619
    %v1628 = vsel %vm771, %v1622, %v1621
    %v1631 = vcombine.low %v1627, %v1628
    %v1633 = vunpack.c.l.s4 1934713408
    %v1634 = vunpack.c.0.s8 %v1633
    %v1635 = vlaneseq
    %v1636 = vshrl.u32 %v1635, 7
    %v1637 = vsub.s32 %v1634, %v1636
    %v1638 = vrot.slane %v1631, %v1637
    %v1639 = vcombine.high %v1638, 0.0
    %v1640 = vld [vmem:[#allocation5] sm:$0xff]
    %v1641 = vld [vmem:[#allocation5 + $0x8] sm:$0xff]
    %v1642 = vld [vmem:[#allocation5 + $0x10] sm:$0xff]
    %v1643 = vld [vmem:[#allocation5 + $0x18] sm:$0xff]
    %v1644 = vld [vmem:[#allocation5 + $0x20] sm:$0xff]
    %v1645 = vld [vmem:[#allocation5 + $0x28] sm:$0xff]
    %v1646 = vld [vmem:[#allocation5 + $0x30] sm:$0xff]
    %v1647 = vld [vmem:[#allocation5 + $0x38] sm:$0xff]
    %v1648 = vld [vmem:[#allocation5 + $0x40] sm:$0xff]
    %v1649 = vld [vmem:[#allocation5 + $0x48] sm:$0xff]
    %v1650 = vld [vmem:[#allocation5 + $0x50] sm:$0xff]
    %v1651 = vld [vmem:[#allocation5 + $0x58] sm:$0xff]
    %v1652 = vld [vmem:[#allocation5 + $0x60] sm:$0xff]
    %v1653 = vld [vmem:[#allocation5 + $0x68] sm:$0xff]
    %v1654 = vld [vmem:[#allocation5 + $0x70] sm:$0xff]
    %v1655 = vld [vmem:[#allocation5 + $0x78] sm:$0xff]
    %v1656 = vld [vmem:[#allocation5 + $0x80] sm:$0xff]
    %v1657 = vld [vmem:[#allocation5 + $0x88] sm:$0xff]
    %v1658 = vld [vmem:[#allocation5 + $0x90] sm:$0xff]
    %v1659 = vld [vmem:[#allocation5 + $0x98] sm:$0xff]
    %v1660 = vld [vmem:[#allocation5 + $0xa0] sm:$0xff]
    %v1661 = vld [vmem:[#allocation5 + $0xa8] sm:$0xff]
    %v1662 = vld [vmem:[#allocation5 + $0xb0] sm:$0xff]
    %v1663 = vld [vmem:[#allocation5 + $0xb8] sm:$0xff]
    %v1664 = vld [vmem:[#allocation5 + $0xc0] sm:$0xff]
    %v1665 = vld [vmem:[#allocation5 + $0xc8] sm:$0xff]
    %v1666 = vld [vmem:[#allocation5 + $0xd0] sm:$0xff]
    %v1667 = vld [vmem:[#allocation5 + $0xd8] sm:$0xff]
    %v1668 = vld [vmem:[#allocation5 + $0xe0] sm:$0xff]
    %v1669 = vld [vmem:[#allocation5 + $0xe8] sm:$0xff]
    %v1670 = vld [vmem:[#allocation5 + $0xf0] sm:$0xff]
    %v1671 = vld [vmem:[#allocation5 + $0xf8] sm:$0xff]
    %v1672 = vld [vmem:[%s5] sm:$0x1]
    %v1674 = vlaneseq
    %v1675 = vshrl.u32 %v1674, 7
    %v1676 = vsub.s32 0, %v1675
    %v1677 = vrot.slane %v1672, %v1676
    %1679 = vmatprep.subr.mxu0 0.0
    %1680 = vmatpush1.msra.mxu0 %v1640
    %1681 = vmatprep.subr.mxu0 0.0
    %1682 = vmatpush1.msra.mxu0 %v1641
    %1683 = vmatprep.subr.mxu0 0.0
    %1684 = vmatpush1.msra.mxu0 %v1642
    %1685 = vmatprep.subr.mxu0 0.0
    %1686 = vmatpush1.msra.mxu0 %v1643
    %1687 = vmatprep.subr.mxu0 0.0
    %1688 = vmatpush1.msra.mxu0 %v1644
    %1689 = vmatprep.subr.mxu0 0.0
    %1690 = vmatpush1.msra.mxu0 %v1645
    %1691 = vmatprep.subr.mxu0 0.0
    %1692 = vmatpush1.msra.mxu0 %v1646
    %1693 = vmatprep.subr.mxu0 0.0
    %1694 = vmatpush1.msra.mxu0 %v1647
    %1695 = vmatprep.subr.mxu0 0.0
    %1696 = vmatpush1.msra.mxu0 %v1648
    %1697 = vmatprep.subr.mxu0 0.0
    %1698 = vmatpush1.msra.mxu0 %v1649
    %1699 = vmatprep.subr.mxu0 0.0
    %1700 = vmatpush1.msra.mxu0 %v1650
    %1701 = vmatprep.subr.mxu0 0.0
    %1702 = vmatpush1.msra.mxu0 %v1651
    %1703 = vmatprep.subr.mxu0 0.0
    %1704 = vmatpush1.msra.mxu0 %v1652
    %1705 = vmatprep.subr.mxu0 0.0
    %1706 = vmatpush1.msra.mxu0 %v1653
    %1707 = vmatprep.subr.mxu0 0.0
    %1708 = vmatpush1.msra.mxu0 %v1654
    %1709 = vmatprep.subr.mxu0 0.0
    %1710 = vmatpush1.msra.mxu0 %v1655
    %1711 = vmatprep.subr.mxu0 0.0
    %1712 = vmatpush1.msra.mxu0 %v1656
    %1713 = vmatprep.subr.mxu0 0.0
    %1714 = vmatpush1.msra.mxu0 %v1657
    %1715 = vmatprep.subr.mxu0 0.0
    %1716 = vmatpush1.msra.mxu0 %v1658
    %1717 = vmatprep.subr.mxu0 0.0
    %1718 = vmatpush1.msra.mxu0 %v1659
    %1719 = vmatprep.subr.mxu0 0.0
    %1720 = vmatpush1.msra.mxu0 %v1660
    %1721 = vmatprep.subr.mxu0 0.0
    %1722 = vmatpush1.msra.mxu0 %v1661
    %1723 = vmatprep.subr.mxu0 0.0
    %1724 = vmatpush1.msra.mxu0 %v1662
    %1725 = vmatprep.subr.mxu0 0.0
    %1726 = vmatpush1.msra.mxu0 %v1663
    %1727 = vmatprep.subr.mxu0 0.0
    %1728 = vmatpush1.msra.mxu0 %v1664
    %1729 = vmatprep.subr.mxu0 0.0
    %1730 = vmatpush1.msra.mxu0 %v1665
    %1731 = vmatprep.subr.mxu0 0.0
    %1732 = vmatpush1.msra.mxu0 %v1666
    %1733 = vmatprep.subr.mxu0 0.0
    %1734 = vmatpush1.msra.mxu0 %v1667
    %1735 = vmatprep.subr.mxu0 0.0
    %1736 = vmatpush1.msra.mxu0 %v1668
    %1737 = vmatprep.subr.mxu0 0.0
    %1738 = vmatpush1.msra.mxu0 %v1669
    %1739 = vmatprep.subr.mxu0 0.0
    %1740 = vmatpush1.msra.mxu0 %v1670
    %1741 = vmatprep.subr.mxu0 0.0
    %1742 = vmatpush1.msra.mxu0 %v1671
    %1743 = vmatprep.mubr.f32.mxu0 %v1639
    %1744 = vmatmul.mubr.f32.gmra.mrb[0].mxu0 %v1638
    %v1745 = vpop.f32.mrb[0].mxu0
    %v1746 = vadd.f32 %v1677, %v1745
    %v1747 = vpop.f32.mrb[0].mxu0
    %1748 = vdwg.mxu0
    %1749 = vst [vmem:[#allocation7] sm:$0x3] %v1746
    // Predicated region
    $region34: #{tpu_custom_call.1} parent=1 // pred_check
      _
    $region35: #{tpu_custom_call.1} parent=1 // pred_check_branch
      %1751 = sbr.rel (0) target = $region37
    $region36: #{tpu_custom_call.1} parent=1 // pred_region
      %s1753 = ssub.s32 32, 32
      %1754 = vsyncadd [#allocation4], %s1753
      %s1756 = sshll.u32 [#allocation7], 4
      %s1757 = int_to_ptr.vmem [resolvable:$true] %s1756
      %1759 = dma.vmem_to_hbm [thread:$0]  %s1757, 32, %s6, [#allocation4]
    $region37: #{tpu_custom_call.1} parent=1 // pred_fallthru
      _
    // Predicated region
    $region38: #{tpu_custom_call.1} parent=1 // pred_check
      _
    $region39: #{tpu_custom_call.1} parent=1 // pred_check_branch
      %1761 = sbr.rel (0) target = $region41
    $region40: #{tpu_custom_call.1} parent=1 // pred_region
      %1762 = dma.done [#allocation4], 32
    $region41: #{tpu_custom_call.1} parent=1 // pred_fallthru
      _
    %1763 = vsyncpa [#allocation3], 1
    %1764 = vsyncpa [#allocation6], 1
    %1765 = vsyncpa [#allocation4], 1

</llo_original>
